<compile_context>
chip_gen: v7x
topology: tpu7x:2x2x1
jax: 0.10.0
libtpu: 0.0.40
codegen_flags: <defaults>
</compile_context>

<pallas_src>
import functools

import numpy as np
import jax
import jax.numpy as jnp
from jax.experimental import pallas as pl
from jax.experimental.pallas import tpu as pltpu


def _round_up(x, m):
    return ((x + m - 1) // m) * m


# ---------------------------------------------------------------------------
# Fused kernel: grid = (pass, batch, point-tile)
#   pass 0: per-class sums / counts (+ optional bf16 feature caching into VMEM)
#   pass 1: EMA prototype update + row-norm (sum-of-squares) accumulation
#   pass 2: contrastive loss
# ---------------------------------------------------------------------------
def fused_kernel(proto_ref, labels_ref, feat_ref,          # inputs
                 loss_ref, proto_out_ref,                  # outputs
                 *scratch,
                 num_classes, temperature, alpha, resident, nt, tp):
    if resident:
        sums, counts_row, proto_n, sq, num, den, feat_slab = scratch
    else:
        sums, counts_row, proto_n, sq, num, den = scratch
        feat_slab = None

    s = pl.program_id(0)                 # pass index: 0 stats, 1 norm, 2 loss
    b = pl.program_id(1)                 # batch index
    t = pl.program_id(2)                 # point tile index
    nb = pl.num_programs(1)
    ntp = pl.num_programs(2)
    nc_pad, c_dim = sums.shape

    labels = labels_ref[...]                                   # (1, tp) int32 (255 = ignore/pad)
    mask = (labels != 255).astype(jnp.float32)                 # (1, tp) computed in-kernel

    class_ids = jax.lax.broadcasted_iota(jnp.int32, (nc_pad, tp), 0)
    row_ids = jax.lax.broadcasted_iota(jnp.int32, (nc_pad, 1), 0)
    row_valid = row_ids < num_classes                          # padded class rows -> False

    first = jnp.logical_and(b == 0, t == 0)
    last = jnp.logical_and(b == nb - 1, t == ntp - 1)

    def feats_bf16():
        # passes 1/2: bf16 features either from the resident VMEM slab or streamed again
        if resident:
            return feat_slab[b * nt + t]
        return feat_ref[0].astype(jnp.bfloat16)

    # ---------------- pass 0: per-class masked feature sums & counts ----------------
    @pl.when(s == 0)
    def _():
        @pl.when(first)
        def _():
            sums[...] = jnp.zeros_like(sums)
            counts_row[...] = jnp.zeros_like(counts_row)

        fb = feat_ref[0].astype(jnp.bfloat16)                  # (C, tp) f32 -> bf16 in-kernel
        if resident:
            feat_slab[b * nt + t] = fb                         # cache; passes 1/2 skip HBM

        onehot = (class_ids == labels).astype(jnp.float32) * mask      # (NCp, tp)
        oh_b = onehot.astype(jnp.bfloat16)
        # (NCp, tp) x (C, tp) contracted over the point (lane) axis -> (NCp, C)
        sums[...] += jax.lax.dot_general(
            oh_b, fb, dimension_numbers=(((1,), (1,)), ((), ())),
            preferred_element_type=jnp.float32)
        # lane-oriented per-class counts (avoids any sublane->lane relayout in pass 1)
        counts_row[...] += jax.lax.dot_general(
            mask.astype(jnp.bfloat16), oh_b,
            dimension_numbers=(((1,), (1,)), ((), ())),
            preferred_element_type=jnp.float32)                # (1, NCp)

    # ---------- pass 1 prologue: EMA prototype update (unique/enumerate quirk) ------
    @pl.when(jnp.logical_and(s == 1, first))
    def _():
        cnt = counts_row[...]                                  # (1, NCp)
        present = (cnt > 0.0).astype(jnp.float32)              # (1, NCp)

        # rank[c] = #present classes with index < c  (standard-orientation MXU matmul)
        r_i = jax.lax.broadcasted_iota(jnp.int32, (nc_pad, nc_pad), 0)
        c_i = jax.lax.broadcasted_iota(jnp.int32, (nc_pad, nc_pad), 1)
        lt = (r_i < c_i).astype(jnp.float32)                   # lt[c', c] = [c' < c]
        rank = jnp.dot(present, lt, preferred_element_type=jnp.float32)   # (1, NCp)

        # permutation matrix: perm[d, c] = [rank[c]==d & present[c]] / count[c]
        d_col = row_ids.astype(jnp.float32)                    # (NCp, 1)
        perm = jnp.where(jnp.logical_and(rank == d_col, present > 0.5),
                         1.0 / jnp.maximum(cnt, 1.0), 0.0)     # (NCp, NCp)
        gathered = jnp.dot(perm, sums[...],
                           preferred_element_type=jnp.float32)  # (NCp, C): d-th present mean

        num_present = jnp.sum(present, axis=1, keepdims=True)  # (1, 1)
        updated = row_ids < num_present.astype(jnp.int32)      # rows 0..num_present-1
        proto_ema = jnp.where(updated,
                              alpha * gathered + (1.0 - alpha) * proto_ref[...],
                              proto_ref[...])
        # self.prototypes = F.normalize(self.prototypes)   (dim=1, eps=1e-12)
        rn = jnp.sqrt(jnp.sum(proto_ema * proto_ema, axis=1, keepdims=True))
        proto_n[...] = proto_ema / jnp.maximum(rn, 1e-12)
        sq[...] = jnp.zeros_like(sq)

    # ------ pass 1: accumulate per-row sum of squares of masked prototypes @ feats --
    @pl.when(s == 1)
    def _():
        fb = feats_bf16()
        pn = proto_n[...].astype(jnp.bfloat16)
        mdot = jnp.dot(pn, fb, preferred_element_type=jnp.float32) * mask   # (NCp, tp)
        sq[...] += jnp.sum(mdot * mdot, axis=1, keepdims=True)

    # ---------------------- pass 2: contrastive loss accumulation -------------------
    @pl.when(jnp.logical_and(s == 2, first))
    def _():
        num[...] = jnp.zeros_like(num)
        den[...] = jnp.zeros_like(den)

    @pl.when(s == 2)
    def _():
        fb = feats_bf16()
        pn = proto_n[...].astype(jnp.bfloat16)
        mdot = jnp.dot(pn, fb, preferred_element_type=jnp.float32) * mask   # (NCp, tp)
        # F.normalize(dim=-1) / T folded into one (NCp, 1) scale
        inv = (1.0 / temperature) / jnp.maximum(jnp.sqrt(sq[...]), 1e-12)
        pf = jnp.where(row_valid, mdot * inv, -1e30)                        # (NCp, tp)
        # robust log-sum-exp (shift-invariant, guards against small T / tiny row norms)
        mx = jnp.max(pf, axis=0, keepdims=True)                             # (1, tp)
        a2 = jnp.sum(jnp.exp(pf - mx), axis=0, keepdims=True)               # (1, tp)
        onehot = class_ids == labels
        logit_lab = jnp.sum(jnp.where(onehot, pf, 0.0), axis=0, keepdims=True)  # (1, tp)
        per_pt = (jnp.log(a2) + mx - logit_lab) * mask
        num[...] += jnp.sum(per_pt, axis=1, keepdims=True)
        den[...] += jnp.sum(mask, axis=1, keepdims=True)

    # ------------------------------------ finalize -----------------------------------
    @pl.when(jnp.logical_and(s == 2, last))
    def _():
        loss_ref[...] = num[...] / jnp.maximum(den[...], 1.0)   # guard: all-ignored -> 0
        proto_out_ref[...] = proto_n[...]


# ---------------------------------------------------------------------------
# Wrapper: layout prep (downsample / pad) + one pallas_call
# ---------------------------------------------------------------------------
@functools.partial(jax.jit,
                   static_argnames=("num_classes", "temperature", "alpha", "point_tile",
                                    "resident_vmem_budget_bytes", "force_streaming"))
def contrastive_intra_view_lucas_loss(features, gt_lucas, prototypes, *,
                                      num_classes, temperature, alpha,
                                      point_tile=16384,
                                      resident_vmem_budget_bytes=24 * 1024 * 1024,
                                      force_streaming=False):
    B, C, h, w = features.shape
    hw = h * w
    NC = num_classes
    NC_pad = _round_up(NC, 8)                      # class axis -> sublane multiple

    ds = gt_lucas[:, ::4, ::4]                     # (B, h, w)
    labels = ds.reshape(B, hw).astype(jnp.int32)   # (B, hw)
    feats = features.reshape(B, C, hw)             # free reshape of NCHW; no transpose/cast

    # point tile: multiple of 128, padded (with ignored points / zero features) if needed
    tp = min(point_tile, _round_up(hw, 128))
    tp = max(128, (tp // 128) * 128)
    hw_pad = _round_up(hw, tp)
    pad = hw_pad - hw
    if pad:
        labels = jnp.pad(labels, ((0, 0), (0, pad)), constant_values=255)
        feats = jnp.pad(feats, ((0, 0), (0, 0), (0, pad)))
    nt = hw_pad // tp
    labels = labels.reshape(1, B * hw_pad)

    proto_in = jnp.zeros((NC_pad, C), jnp.float32).at[:NC].set(
        prototypes.astype(jnp.float32))

    # ---- VMEM budgeting / feature-residency decision (generation-safe default) ----
    tile_bytes = C * tp * 4                        # one streamed f32 feature tile
    slab_bytes = C * B * hw_pad * 2                # bf16 resident slab
    fixed_bytes = (3 * NC_pad * C + 2 * NC_pad + 16) * 4 + 2 * tp * 4 + (1 << 20)
    stream_bytes = 2 * tile_bytes + fixed_bytes    # double-buffered tiles + scratch
    resident = (not force_streaming) and (stream_bytes + slab_bytes
                                          <= resident_vmem_budget_bytes)
    vmem_need = stream_bytes + (slab_bytes if resident else 0)
    vmem_limit = int(min(64 << 20, max(32 << 20, int(1.25 * vmem_need))))

    if resident:
        # pin the feature block after pass 0 -> features are DMA'd from HBM exactly once
        def feat_idx(s, b, t):
            return (jnp.where(s == 0, b, B - 1), 0, jnp.where(s == 0, t, nt - 1))
    else:
        def feat_idx(s, b, t):
            return (b, 0, t)

    in_specs = [
        pl.BlockSpec((NC_pad, C), lambda s, b, t: (0, 0)),          # prototypes (resident)
        pl.BlockSpec((1, tp), lambda s, b, t: (0, b * nt + t)),     # labels tile
        pl.BlockSpec((1, C, tp), feat_idx),                         # features tile (f32)
    ]
    out_specs = [
        pl.BlockSpec((1, 1), lambda s, b, t: (0, 0)),
        pl.BlockSpec((NC_pad, C), lambda s, b, t: (0, 0)),
    ]
    scratch = [
        pltpu.VMEM((NC_pad, C), jnp.float32),   # per-class feature sums
        pltpu.VMEM((1, NC_pad), jnp.float32),   # lane-oriented per-class counts
        pltpu.VMEM((NC_pad, C), jnp.float32),   # EMA-updated + normalized prototypes
        pltpu.VMEM((NC_pad, 1), jnp.float32),   # per-class row sum-of-squares
        pltpu.VMEM((1, 1), jnp.float32),        # loss numerator
        pltpu.VMEM((1, 1), jnp.float32),        # valid-point count
    ]
    if resident:
        scratch.append(pltpu.VMEM((B * nt, C, tp), jnp.bfloat16))   # bf16 feature slab

    kernel = functools.partial(fused_kernel, num_classes=NC, temperature=temperature,
                               alpha=alpha, resident=resident, nt=nt, tp=tp)

    pts = B * hw_pad
    loss, proto_out = pl.pallas_call(
        kernel,
        grid=(3, B, nt),
        in_specs=in_specs,
        out_specs=out_specs,
        out_shape=[
            jax.ShapeDtypeStruct((1, 1), jnp.float32),
            jax.ShapeDtypeStruct((NC_pad, C), jnp.float32),
        ],
        scratch_shapes=scratch,
        compiler_params=pltpu.CompilerParams(
            # all accumulators are shared across the grid -> strictly sequential axes
            dimension_semantics=("arbitrary", "arbitrary", "arbitrary"),
            vmem_limit_bytes=vmem_limit,
        ),
        cost_estimate=pl.CostEstimate(
            flops=int(3 * 2 * NC_pad * C * pts),
            transcendentals=int(NC_pad * pts),
            bytes_accessed=int(C * pts * 4 * (1 if resident else 3)
                               + 3 * pts * 4 + 2 * NC_pad * C * 4),
        ),
    )(proto_in, labels, feats)

    return loss[0, 0], proto_out[:NC]


# ---------------------------------------------------------------------------
# NumPy reference mirroring the PyTorch forward (eager, dynamic shapes)
# ---------------------------------------------------------------------------
def _reference(features, gt_lucas, prototypes, alpha, temperature):
    ds = gt_lucas[:, ::4, ::4]
    mask = ds != 255
    labels = ds[mask]
    feats = np.transpose(features, (0, 2, 3, 1))[mask].astype(np.float64)
    protos = prototypes.astype(np.float64).copy()
    for idx, c in enumerate(np.unique(labels)):
        m = feats[labels == c].mean(axis=0)
        protos[idx] = alpha * m + (1.0 - alpha) * protos[idx]
    protos = protos / np.maximum(np.linalg.norm(protos, axis=1, keepdims=True), 1e-12)
    pf = protos @ feats.T
    pf = pf / np.maximum(np.linalg.norm(pf, axis=-1, keepdims=True), 1e-12)
    pf = pf / temperature
    E = np.exp(pf)
    A1 = E[labels, np.arange(len(labels))]
    A2 = E.sum(axis=0)
    loss = np.mean(-np.log(A1 / A2))
    return float(loss), protos.astype(np.float32)


if __name__ == "__main__":
    B, C, H, W = 2, 32, 128, 128        # features at 1/4 resolution -> (2, 32, 32, 32)
    NUM_CLASSES = 9
    TEMPERATURE = 0.1
    ALPHA = 0.99

    key = jax.random.PRNGKey(0)
    k1, k2, k3, k4 = jax.random.split(key, 4)
    features = jax.random.normal(k1, (B, C, H // 4, W // 4), dtype=jnp.float32)
    # make class 3 absent so the torch.unique/enumerate prototype-permutation is exercised
    labels_full = jax.random.randint(k2, (B, H, W), 0, NUM_CLASSES - 1)
    labels_full = jnp.where(labels_full >= 3, labels_full + 1, labels_full)
    ignore = jax.random.bernoulli(k3, 0.3, (B, H, W))
    gt_lucas = jnp.where(ignore, 255, labels_full).astype(jnp.int32)
    # deterministic stand-in for torch.rand((num_classes, feature_dim))
    prototypes = jax.random.uniform(k4, (NUM_CLASSES, C), dtype=jnp.float32)

    # reference on bf16-rounded features (the kernel runs the MXU dots in bf16)
    features_bf = np.asarray(features.astype(jnp.bfloat16).astype(jnp.float32))
    ref_loss, ref_protos = _reference(features_bf, np.asarray(gt_lucas),
                                      np.asarray(prototypes), ALPHA, TEMPERATURE)

    configs = [
        dict(point_tile=16384, force_streaming=False),  # VMEM-resident slab, 1 tile/batch
        dict(point_tile=512, force_streaming=True),     # streaming fallback, 2 tiles/batch
        dict(point_tile=384, force_streaming=False),    # resident + ragged-tail padding
    ]
    for cfg in configs:
        loss, new_protos = contrastive_intra_view_lucas_loss(
            features, gt_lucas, prototypes,
            num_classes=NUM_CLASSES, temperature=TEMPERATURE, alpha=ALPHA, **cfg)
        jax.block_until_ready((loss, new_protos))
        assert np.isfinite(float(loss))
        np.testing.assert_allclose(float(loss), ref_loss, rtol=3e-3, atol=3e-3)
        np.testing.assert_allclose(np.asarray(new_protos), ref_protos, rtol=3e-3, atol=3e-3)

    print("KERNEL_OK")
</pallas_src>

<mosaic_0001>
module attributes {stable_mosaic.version = 11 : i64} {
  func.func @fused_kernel(%arg0: i32, %arg1: i32, %arg2: i32, %arg3: memref<16x32xf32, #tpu.memory_space<vmem>>, %arg4: memref<1x1024xi32, #tpu.memory_space<vmem>>, %arg5: memref<1x32x1024xf32, #tpu.memory_space<vmem>>, %arg6: memref<1x1xf32, #tpu.memory_space<vmem>>, %arg7: memref<16x32xf32, #tpu.memory_space<vmem>>, %arg8: memref<16x32xf32, #tpu.memory_space<vmem>>, %arg9: memref<1x16xf32, #tpu.memory_space<vmem>>, %arg10: memref<16x32xf32, #tpu.memory_space<vmem>>, %arg11: memref<16x1xf32, #tpu.memory_space<vmem>>, %arg12: memref<1x1xf32, #tpu.memory_space<vmem>>, %arg13: memref<1x1xf32, #tpu.memory_space<vmem>>, %arg14: memref<2x32x1024xbf16, #tpu.memory_space<vmem>>) attributes {dimension_semantics = [#tpu.dimension_semantics<arbitrary>, #tpu.dimension_semantics<arbitrary>, #tpu.dimension_semantics<arbitrary>], iteration_bounds = array<i64: 3, 2, 1>, scalar_prefetch = 0 : i64, scratch_operands = 7 : i64, tpu.core_type = #tpu.core_type<tc>, window_params = [{pipeline_mode = #tpu.pipeline_mode<synchronous>, transform_indices = @transform_0, window_bounds = array<i64: 16, 32>}, {transform_indices = @transform_1, window_bounds = array<i64: 1, 1024>}, {transform_indices = @transform_2, window_bounds = array<i64: 1, 32, 1024>}, {pipeline_mode = #tpu.pipeline_mode<synchronous>, transform_indices = @transform_3, window_bounds = array<i64: 1, 1>}, {pipeline_mode = #tpu.pipeline_mode<synchronous>, transform_indices = @transform_4, window_bounds = array<i64: 16, 32>}]} {
    %c0 = arith.constant 0 : index
    %c0_0 = arith.constant 0 : index
    %0 = vector.load %arg4[%c0, %c0_0] : memref<1x1024xi32, #tpu.memory_space<vmem>>, vector<1x1024xi32>
    %c255_i32 = arith.constant 255 : i32
    %1 = vector.broadcast %c255_i32 : i32 to vector<1x1024xi32>
    %2 = arith.cmpi ne, %0, %1 : vector<1x1024xi32>
    %3 = arith.extui %2 : vector<1x1024xi1> to vector<1x1024xi32>
    %4 = arith.sitofp %3 : vector<1x1024xi32> to vector<1x1024xf32>
    %5 = tpu.iota {dimensions = array<i32: 0>} : vector<16x1024xi32>
    %6 = tpu.iota {dimensions = array<i32: 0>} : vector<16x1xi32>
    %c9_i32 = arith.constant 9 : i32
    %7 = vector.broadcast %c9_i32 : i32 to vector<16x1xi32>
    %8 = arith.cmpi slt, %6, %7 : vector<16x1xi32>
    %c0_i32 = arith.constant 0 : i32
    %9 = arith.cmpi eq, %arg1, %c0_i32 : i32
    %c0_i32_1 = arith.constant 0 : i32
    %10 = arith.cmpi eq, %arg2, %c0_i32_1 : i32
    %11 = arith.andi %9, %10 : i1
    %c1_i32 = arith.constant 1 : i32
    %12 = arith.cmpi eq, %arg1, %c1_i32 : i32
    %c0_i32_2 = arith.constant 0 : i32
    %13 = arith.cmpi eq, %arg2, %c0_i32_2 : i32
    %14 = arith.andi %12, %13 : i1
    %c0_i32_3 = arith.constant 0 : i32
    %15 = arith.cmpi eq, %arg0, %c0_i32_3 : i32
    %16 = arith.extui %15 : i1 to i32
    %c0_i32_4 = arith.constant 0 : i32
    %17 = arith.cmpi ne, %16, %c0_i32_4 : i32
    scf.if %17 {
      %36 = arith.extui %11 : i1 to i32
      %c0_i32_14 = arith.constant 0 : i32
      %37 = arith.cmpi ne, %36, %c0_i32_14 : i32
      scf.if %37 {
        %cst_30 = arith.constant 0.000000e+00 : f32
        %63 = vector.broadcast %cst_30 : f32 to vector<16x32xf32>
        %c0_31 = arith.constant 0 : index
        %c0_32 = arith.constant 0 : index
        %64 = vector.load %arg8[%c0_31, %c0_32] : memref<16x32xf32, #tpu.memory_space<vmem>>, vector<16x32xf32>
        tpu.vector_store %arg8[%c0_31, %c0_32], %63 {strides = array<i32>} : memref<16x32xf32, #tpu.memory_space<vmem>>, vector<16x32xf32>,
        %cst_33 = arith.constant 0.000000e+00 : f32
        %65 = vector.broadcast %cst_33 : f32 to vector<1x16xf32>
        %c0_34 = arith.constant 0 : index
        %c0_35 = arith.constant 0 : index
        %66 = vector.load %arg9[%c0_34, %c0_35] : memref<1x16xf32, #tpu.memory_space<vmem>>, vector<1x16xf32>
        tpu.vector_store %arg9[%c0_34, %c0_35], %65 {strides = array<i32>} : memref<1x16xf32, #tpu.memory_space<vmem>>, vector<1x16xf32>,
      } else {
      }
      %c0_15 = arith.constant 0 : index
      %c0_16 = arith.constant 0 : index
      %c0_17 = arith.constant 0 : index
      %38 = vector.load %arg5[%c0_15, %c0_16, %c0_17] : memref<1x32x1024xf32, #tpu.memory_space<vmem>>, vector<1x32x1024xf32>
      %39 = vector.shape_cast %38 : vector<1x32x1024xf32> to vector<32x1024xf32>
      %40 = arith.truncf %39 : vector<32x1024xf32> to vector<32x1024xbf16>
      %c1_i32_18 = arith.constant 1 : i32
      %41 = arith.muli %arg1, %c1_i32_18 : i32
      %42 = arith.addi %41, %arg2 : i32
      %43 = arith.index_cast %42 : i32 to index
      %c0_19 = arith.constant 0 : index
      %c0_20 = arith.constant 0 : index
      %44 = vector.load %arg14[%43, %c0_19, %c0_20] : memref<2x32x1024xbf16, #tpu.memory_space<vmem>>, vector<1x32x1024xbf16>
      %45 = vector.shape_cast %44 : vector<1x32x1024xbf16> to vector<32x1024xbf16>
      %46 = vector.shape_cast %40 : vector<32x1024xbf16> to vector<1x32x1024xbf16>
      tpu.vector_store %arg14[%43, %c0_19, %c0_20], %46 {strides = array<i32>} : memref<2x32x1024xbf16, #tpu.memory_space<vmem>>, vector<1x32x1024xbf16>,
      %47 = vector.broadcast %0 : vector<1x1024xi32> to vector<16x1024xi32>
      %48 = arith.cmpi eq, %5, %47 : vector<16x1024xi32>
      %49 = arith.extui %48 : vector<16x1024xi1> to vector<16x1024xi32>
      %50 = arith.sitofp %49 : vector<16x1024xi32> to vector<16x1024xf32>
      %51 = vector.broadcast %4 : vector<1x1024xf32> to vector<16x1024xf32>
      %52 = arith.mulf %50, %51 : vector<16x1024xf32>
      %53 = arith.truncf %52 : vector<16x1024xf32> to vector<16x1024xbf16>
      %c0_21 = arith.constant 0 : index
      %c0_22 = arith.constant 0 : index
      %54 = vector.load %arg8[%c0_21, %c0_22] : memref<16x32xf32, #tpu.memory_space<vmem>>, vector<16x32xf32>
      %cst = arith.constant dense<0.000000e+00> : vector<16x32xf32>
      %55 = tpu.matmul %53, %40, %cst {dimension_numbers = #tpu.dot_dimension_numbers<[1], [1], [0], [0], [0, 0, 1, 0], [], []>} : vector<16x1024xbf16>, vector<32x1024xbf16>, vector<16x32xf32> -> vector<16x32xf32>
      %56 = arith.addf %54, %55 : vector<16x32xf32>
      %c0_23 = arith.constant 0 : index
      %c0_24 = arith.constant 0 : index
      %57 = vector.load %arg8[%c0_23, %c0_24] : memref<16x32xf32, #tpu.memory_space<vmem>>, vector<16x32xf32>
      tpu.vector_store %arg8[%c0_23, %c0_24], %56 {strides = array<i32>} : memref<16x32xf32, #tpu.memory_space<vmem>>, vector<16x32xf32>,
      %c0_25 = arith.constant 0 : index
      %c0_26 = arith.constant 0 : index
      %58 = vector.load %arg9[%c0_25, %c0_26] : memref<1x16xf32, #tpu.memory_space<vmem>>, vector<1x16xf32>
      %59 = arith.truncf %4 : vector<1x1024xf32> to vector<1x1024xbf16>
      %cst_27 = arith.constant dense<0.000000e+00> : vector<1x16xf32>
      %60 = tpu.matmul %59, %53, %cst_27 {dimension_numbers = #tpu.dot_dimension_numbers<[1], [1], [0], [0], [0, 0, 1, 0], [], []>} : vector<1x1024xbf16>, vector<16x1024xbf16>, vector<1x16xf32> -> vector<1x16xf32>
      %61 = arith.addf %58, %60 : vector<1x16xf32>
      %c0_28 = arith.constant 0 : index
      %c0_29 = arith.constant 0 : index
      %62 = vector.load %arg9[%c0_28, %c0_29] : memref<1x16xf32, #tpu.memory_space<vmem>>, vector<1x16xf32>
      tpu.vector_store %arg9[%c0_28, %c0_29], %61 {strides = array<i32>} : memref<1x16xf32, #tpu.memory_space<vmem>>, vector<1x16xf32>,
    } else {
    }
    %c1_i32_5 = arith.constant 1 : i32
    %18 = arith.cmpi eq, %arg0, %c1_i32_5 : i32
    %19 = arith.andi %18, %11 : i1
    %20 = arith.extui %19 : i1 to i32
    %c0_i32_6 = arith.constant 0 : i32
    %21 = arith.cmpi ne, %20, %c0_i32_6 : i32
    scf.if %21 {
      %c0_14 = arith.constant 0 : index
      %c0_15 = arith.constant 0 : index
      %36 = vector.load %arg9[%c0_14, %c0_15] : memref<1x16xf32, #tpu.memory_space<vmem>>, vector<1x16xf32>
      %cst = arith.constant 0.000000e+00 : f32
      %37 = vector.broadcast %cst : f32 to vector<1x16xf32>
      %38 = arith.cmpf ogt, %36, %37 : vector<1x16xf32>
      %39 = arith.extui %38 : vector<1x16xi1> to vector<1x16xi32>
      %40 = arith.sitofp %39 : vector<1x16xi32> to vector<1x16xf32>
      %41 = tpu.iota {dimensions = array<i32: 0>} : vector<16x16xi32>
      %42 = tpu.iota {dimensions = array<i32: 1>} : vector<16x16xi32>
      %43 = arith.cmpi slt, %41, %42 : vector<16x16xi32>
      %44 = arith.extui %43 : vector<16x16xi1> to vector<16x16xi32>
      %45 = arith.sitofp %44 : vector<16x16xi32> to vector<16x16xf32>
      %cst_16 = arith.constant dense<0.000000e+00> : vector<1x16xf32>
      %46 = tpu.matmul %40, %45, %cst_16 {dimension_numbers = #tpu.dot_dimension_numbers<[1], [0], [0], [1], [0, 0, 1, 1], [], []>} : vector<1x16xf32>, vector<16x16xf32>, vector<1x16xf32> -> vector<1x16xf32>
      %47 = arith.sitofp %6 : vector<16x1xi32> to vector<16x1xf32>
      %48 = vector.broadcast %46 : vector<1x16xf32> to vector<16x16xf32>
      %49 = vector.broadcast %47 : vector<16x1xf32> to vector<16x16xf32>
      %50 = arith.cmpf oeq, %48, %49 : vector<16x16xf32>
      %cst_17 = arith.constant 5.000000e-01 : f32
      %51 = vector.broadcast %cst_17 : f32 to vector<1x16xf32>
      %52 = arith.cmpf ogt, %40, %51 : vector<1x16xf32>
      %53 = vector.broadcast %52 : vector<1x16xi1> to vector<16x16xi1>
      %54 = arith.andi %50, %53 : vector<16x16xi1>
      %cst_18 = arith.constant 1.000000e+00 : f32
      %55 = vector.broadcast %cst_18 : f32 to vector<1x16xf32>
      %56 = arith.maximumf %36, %55 : vector<1x16xf32>
      %cst_19 = arith.constant 1.000000e+00 : f32
      %57 = vector.broadcast %cst_19 : f32 to vector<1x16xf32>
      %58 = arith.divf %57, %56 : vector<1x16xf32>
      %cst_20 = arith.constant 0.000000e+00 : f32
      %59 = vector.shape_cast %58 : vector<1x16xf32> to vector<1x16xf32>
      %60 = vector.broadcast %59 : vector<1x16xf32> to vector<16x16xf32>
      %61 = vector.broadcast %cst_20 : f32 to vector<16x16xf32>
      %62 = arith.select %54, %60, %61 : vector<16x16xi1>, vector<16x16xf32>
      %c0_21 = arith.constant 0 : index
      %c0_22 = arith.constant 0 : index
      %63 = vector.load %arg8[%c0_21, %c0_22] : memref<16x32xf32, #tpu.memory_space<vmem>>, vector<16x32xf32>
      %cst_23 = arith.constant dense<0.000000e+00> : vector<16x32xf32>
      %64 = tpu.matmul %62, %63, %cst_23 {dimension_numbers = #tpu.dot_dimension_numbers<[1], [0], [0], [1], [0, 0, 1, 1], [], []>} : vector<16x16xf32>, vector<16x32xf32>, vector<16x32xf32> -> vector<16x32xf32>
      %cst_24 = arith.constant dense<0.000000e+00> : vector<1xf32>
      %65 = vector.multi_reduction <add>, %40, %cst_24 [1] : vector<1x16xf32> to vector<1xf32>
      %66 = vector.shape_cast %65 : vector<1xf32> to vector<1x1xf32>
      %67 = arith.fptosi %66 : vector<1x1xf32> to vector<1x1xi32>
      %68 = vector.broadcast %67 : vector<1x1xi32> to vector<16x1xi32>
      %69 = arith.cmpi slt, %6, %68 : vector<16x1xi32>
      %cst_25 = arith.constant 9.900000e-01 : f32
      %70 = vector.broadcast %cst_25 : f32 to vector<16x32xf32>
      %71 = arith.mulf %70, %64 : vector<16x32xf32>
      %c0_26 = arith.constant 0 : index
      %c0_27 = arith.constant 0 : index
      %72 = vector.load %arg3[%c0_26, %c0_27] : memref<16x32xf32, #tpu.memory_space<vmem>>, vector<16x32xf32>
      %cst_28 = arith.constant 0.00999999977 : f32
      %73 = vector.broadcast %cst_28 : f32 to vector<16x32xf32>
      %74 = arith.mulf %73, %72 : vector<16x32xf32>
      %75 = arith.addf %71, %74 : vector<16x32xf32>
      %c0_29 = arith.constant 0 : index
      %c0_30 = arith.constant 0 : index
      %76 = vector.load %arg3[%c0_29, %c0_30] : memref<16x32xf32, #tpu.memory_space<vmem>>, vector<16x32xf32>
      %77 = vector.shape_cast %69 : vector<16x1xi1> to vector<16x1xi1>
      %78 = vector.broadcast %77 : vector<16x1xi1> to vector<16x32xi1>
      %79 = arith.select %78, %75, %76 : vector<16x32xi1>, vector<16x32xf32>
      %80 = arith.mulf %79, %79 : vector<16x32xf32>
      %cst_31 = arith.constant dense<0.000000e+00> : vector<16xf32>
      %81 = vector.multi_reduction <add>, %80, %cst_31 [1] : vector<16x32xf32> to vector<16xf32>
      %82 = vector.shape_cast %81 : vector<16xf32> to vector<16x1xf32>
      %83 = math.sqrt %82 : vector<16x1xf32>
      %cst_32 = arith.constant 9.99999996E-13 : f32
      %84 = vector.broadcast %cst_32 : f32 to vector<16x1xf32>
      %85 = arith.maximumf %83, %84 : vector<16x1xf32>
      %86 = vector.broadcast %85 : vector<16x1xf32> to vector<16x32xf32>
      %87 = arith.divf %79, %86 : vector<16x32xf32>
      %c0_33 = arith.constant 0 : index
      %c0_34 = arith.constant 0 : index
      %88 = vector.load %arg10[%c0_33, %c0_34] : memref<16x32xf32, #tpu.memory_space<vmem>>, vector<16x32xf32>
      tpu.vector_store %arg10[%c0_33, %c0_34], %87 {strides = array<i32>} : memref<16x32xf32, #tpu.memory_space<vmem>>, vector<16x32xf32>,
      %cst_35 = arith.constant 0.000000e+00 : f32
      %89 = vector.broadcast %cst_35 : f32 to vector<16x1xf32>
      %c0_36 = arith.constant 0 : index
      %c0_37 = arith.constant 0 : index
      %90 = vector.load %arg11[%c0_36, %c0_37] : memref<16x1xf32, #tpu.memory_space<vmem>>, vector<16x1xf32>
      tpu.vector_store %arg11[%c0_36, %c0_37], %89 {strides = array<i32>} : memref<16x1xf32, #tpu.memory_space<vmem>>, vector<16x1xf32>,
    } else {
    }
    %c1_i32_7 = arith.constant 1 : i32
    %22 = arith.cmpi eq, %arg0, %c1_i32_7 : i32
    %23 = arith.extui %22 : i1 to i32
    %c0_i32_8 = arith.constant 0 : i32
    %24 = arith.cmpi ne, %23, %c0_i32_8 : i32
    scf.if %24 {
      %c1_i32_14 = arith.constant 1 : i32
      %36 = arith.muli %arg1, %c1_i32_14 : i32
      %37 = arith.addi %36, %arg2 : i32
      %38 = arith.index_cast %37 : i32 to index
      %c0_15 = arith.constant 0 : index
      %c0_16 = arith.constant 0 : index
      %39 = vector.load %arg14[%38, %c0_15, %c0_16] : memref<2x32x1024xbf16, #tpu.memory_space<vmem>>, vector<1x32x1024xbf16>
      %40 = vector.shape_cast %39 : vector<1x32x1024xbf16> to vector<32x1024xbf16>
      %c0_17 = arith.constant 0 : index
      %c0_18 = arith.constant 0 : index
      %41 = vector.load %arg10[%c0_17, %c0_18] : memref<16x32xf32, #tpu.memory_space<vmem>>, vector<16x32xf32>
      %42 = arith.truncf %41 : vector<16x32xf32> to vector<16x32xbf16>
      %cst = arith.constant dense<0.000000e+00> : vector<16x1024xf32>
      %43 = tpu.matmul %42, %40, %cst {dimension_numbers = #tpu.dot_dimension_numbers<[1], [0], [0], [1], [0, 0, 1, 1], [], []>} : vector<16x32xbf16>, vector<32x1024xbf16>, vector<16x1024xf32> -> vector<16x1024xf32>
      %44 = vector.broadcast %4 : vector<1x1024xf32> to vector<16x1024xf32>
      %45 = arith.mulf %43, %44 : vector<16x1024xf32>
      %c0_19 = arith.constant 0 : index
      %c0_20 = arith.constant 0 : index
      %46 = vector.load %arg11[%c0_19, %c0_20] : memref<16x1xf32, #tpu.memory_space<vmem>>, vector<16x1xf32>
      %47 = arith.mulf %45, %45 : vector<16x1024xf32>
      %cst_21 = arith.constant dense<0.000000e+00> : vector<16xf32>
      %48 = vector.multi_reduction <add>, %47, %cst_21 [1] : vector<16x1024xf32> to vector<16xf32>
      %49 = vector.shape_cast %48 : vector<16xf32> to vector<16x1xf32>
      %50 = arith.addf %46, %49 : vector<16x1xf32>
      %c0_22 = arith.constant 0 : index
      %c0_23 = arith.constant 0 : index
      %51 = vector.load %arg11[%c0_22, %c0_23] : memref<16x1xf32, #tpu.memory_space<vmem>>, vector<16x1xf32>
      tpu.vector_store %arg11[%c0_22, %c0_23], %50 {strides = array<i32>} : memref<16x1xf32, #tpu.memory_space<vmem>>, vector<16x1xf32>,
    } else {
    }
    %c2_i32 = arith.constant 2 : i32
    %25 = arith.cmpi eq, %arg0, %c2_i32 : i32
    %26 = arith.andi %25, %11 : i1
    %27 = arith.extui %26 : i1 to i32
    %c0_i32_9 = arith.constant 0 : i32
    %28 = arith.cmpi ne, %27, %c0_i32_9 : i32
    scf.if %28 {
      %cst = arith.constant 0.000000e+00 : f32
      %36 = vector.broadcast %cst : f32 to vector<1x1xf32>
      %c0_14 = arith.constant 0 : index
      %c0_15 = arith.constant 0 : index
      %37 = vector.load %arg12[%c0_14, %c0_15] : memref<1x1xf32, #tpu.memory_space<vmem>>, vector<1x1xf32>
      tpu.vector_store %arg12[%c0_14, %c0_15], %36 {strides = array<i32>} : memref<1x1xf32, #tpu.memory_space<vmem>>, vector<1x1xf32>,
      %cst_16 = arith.constant 0.000000e+00 : f32
      %38 = vector.broadcast %cst_16 : f32 to vector<1x1xf32>
      %c0_17 = arith.constant 0 : index
      %c0_18 = arith.constant 0 : index
      %39 = vector.load %arg13[%c0_17, %c0_18] : memref<1x1xf32, #tpu.memory_space<vmem>>, vector<1x1xf32>
      tpu.vector_store %arg13[%c0_17, %c0_18], %38 {strides = array<i32>} : memref<1x1xf32, #tpu.memory_space<vmem>>, vector<1x1xf32>,
    } else {
    }
    %c2_i32_10 = arith.constant 2 : i32
    %29 = arith.cmpi eq, %arg0, %c2_i32_10 : i32
    %30 = arith.extui %29 : i1 to i32
    %c0_i32_11 = arith.constant 0 : i32
    %31 = arith.cmpi ne, %30, %c0_i32_11 : i32
    scf.if %31 {
      %c1_i32_14 = arith.constant 1 : i32
      %36 = arith.muli %arg1, %c1_i32_14 : i32
      %37 = arith.addi %36, %arg2 : i32
      %38 = arith.index_cast %37 : i32 to index
      %c0_15 = arith.constant 0 : index
      %c0_16 = arith.constant 0 : index
      %39 = vector.load %arg14[%38, %c0_15, %c0_16] : memref<2x32x1024xbf16, #tpu.memory_space<vmem>>, vector<1x32x1024xbf16>
      %40 = vector.shape_cast %39 : vector<1x32x1024xbf16> to vector<32x1024xbf16>
      %c0_17 = arith.constant 0 : index
      %c0_18 = arith.constant 0 : index
      %41 = vector.load %arg10[%c0_17, %c0_18] : memref<16x32xf32, #tpu.memory_space<vmem>>, vector<16x32xf32>
      %42 = arith.truncf %41 : vector<16x32xf32> to vector<16x32xbf16>
      %cst = arith.constant dense<0.000000e+00> : vector<16x1024xf32>
      %43 = tpu.matmul %42, %40, %cst {dimension_numbers = #tpu.dot_dimension_numbers<[1], [0], [0], [1], [0, 0, 1, 1], [], []>} : vector<16x32xbf16>, vector<32x1024xbf16>, vector<16x1024xf32> -> vector<16x1024xf32>
      %44 = vector.broadcast %4 : vector<1x1024xf32> to vector<16x1024xf32>
      %45 = arith.mulf %43, %44 : vector<16x1024xf32>
      %c0_19 = arith.constant 0 : index
      %c0_20 = arith.constant 0 : index
      %46 = vector.load %arg11[%c0_19, %c0_20] : memref<16x1xf32, #tpu.memory_space<vmem>>, vector<16x1xf32>
      %47 = math.sqrt %46 : vector<16x1xf32>
      %cst_21 = arith.constant 9.99999996E-13 : f32
      %48 = vector.broadcast %cst_21 : f32 to vector<16x1xf32>
      %49 = arith.maximumf %47, %48 : vector<16x1xf32>
      %cst_22 = arith.constant 1.000000e+01 : f32
      %50 = vector.broadcast %cst_22 : f32 to vector<16x1xf32>
      %51 = arith.divf %50, %49 : vector<16x1xf32>
      %52 = vector.broadcast %51 : vector<16x1xf32> to vector<16x1024xf32>
      %53 = arith.mulf %45, %52 : vector<16x1024xf32>
      %cst_23 = arith.constant -1.000000e+30 : f32
      %54 = vector.shape_cast %8 : vector<16x1xi1> to vector<16x1xi1>
      %55 = vector.broadcast %54 : vector<16x1xi1> to vector<16x1024xi1>
      %56 = vector.broadcast %cst_23 : f32 to vector<16x1024xf32>
      %57 = arith.select %55, %53, %56 : vector<16x1024xi1>, vector<16x1024xf32>
      %cst_24 = arith.constant dense<0xFF800000> : vector<1024xf32>
      %58 = vector.multi_reduction <maximumf>, %57, %cst_24 [0] : vector<16x1024xf32> to vector<1024xf32>
      %59 = vector.shape_cast %58 : vector<1024xf32> to vector<1x1024xf32>
      %60 = vector.broadcast %59 : vector<1x1024xf32> to vector<16x1024xf32>
      %61 = arith.subf %57, %60 : vector<16x1024xf32>
      %62 = math.exp %61 : vector<16x1024xf32>
      %cst_25 = arith.constant dense<0.000000e+00> : vector<1024xf32>
      %63 = vector.multi_reduction <add>, %62, %cst_25 [0] : vector<16x1024xf32> to vector<1024xf32>
      %64 = vector.shape_cast %63 : vector<1024xf32> to vector<1x1024xf32>
      %65 = vector.broadcast %0 : vector<1x1024xi32> to vector<16x1024xi32>
      %66 = arith.cmpi eq, %5, %65 : vector<16x1024xi32>
      %cst_26 = arith.constant 0.000000e+00 : f32
      %67 = vector.broadcast %cst_26 : f32 to vector<16x1024xf32>
      %68 = arith.select %66, %57, %67 : vector<16x1024xi1>, vector<16x1024xf32>
      %cst_27 = arith.constant dense<0.000000e+00> : vector<1024xf32>
      %69 = vector.multi_reduction <add>, %68, %cst_27 [0] : vector<16x1024xf32> to vector<1024xf32>
      %70 = vector.shape_cast %69 : vector<1024xf32> to vector<1x1024xf32>
      %71 = math.log %64 : vector<1x1024xf32>
      %72 = arith.addf %71, %59 : vector<1x1024xf32>
      %73 = arith.subf %72, %70 : vector<1x1024xf32>
      %74 = arith.mulf %73, %4 : vector<1x1024xf32>
      %c0_28 = arith.constant 0 : index
      %c0_29 = arith.constant 0 : index
      %75 = vector.load %arg12[%c0_28, %c0_29] : memref<1x1xf32, #tpu.memory_space<vmem>>, vector<1x1xf32>
      %cst_30 = arith.constant dense<0.000000e+00> : vector<1xf32>
      %76 = vector.multi_reduction <add>, %74, %cst_30 [1] : vector<1x1024xf32> to vector<1xf32>
      %77 = vector.shape_cast %76 : vector<1xf32> to vector<1x1xf32>
      %78 = arith.addf %75, %77 : vector<1x1xf32>
      %c0_31 = arith.constant 0 : index
      %c0_32 = arith.constant 0 : index
      %79 = vector.load %arg12[%c0_31, %c0_32] : memref<1x1xf32, #tpu.memory_space<vmem>>, vector<1x1xf32>
      tpu.vector_store %arg12[%c0_31, %c0_32], %78 {strides = array<i32>} : memref<1x1xf32, #tpu.memory_space<vmem>>, vector<1x1xf32>,
      %c0_33 = arith.constant 0 : index
      %c0_34 = arith.constant 0 : index
      %80 = vector.load %arg13[%c0_33, %c0_34] : memref<1x1xf32, #tpu.memory_space<vmem>>, vector<1x1xf32>
      %cst_35 = arith.constant dense<0.000000e+00> : vector<1xf32>
      %81 = vector.multi_reduction <add>, %4, %cst_35 [1] : vector<1x1024xf32> to vector<1xf32>
      %82 = vector.shape_cast %81 : vector<1xf32> to vector<1x1xf32>
      %83 = arith.addf %80, %82 : vector<1x1xf32>
      %c0_36 = arith.constant 0 : index
      %c0_37 = arith.constant 0 : index
      %84 = vector.load %arg13[%c0_36, %c0_37] : memref<1x1xf32, #tpu.memory_space<vmem>>, vector<1x1xf32>
      tpu.vector_store %arg13[%c0_36, %c0_37], %83 {strides = array<i32>} : memref<1x1xf32, #tpu.memory_space<vmem>>, vector<1x1xf32>,
    } else {
    }
    %c2_i32_12 = arith.constant 2 : i32
    %32 = arith.cmpi eq, %arg0, %c2_i32_12 : i32
    %33 = arith.andi %32, %14 : i1
    %34 = arith.extui %33 : i1 to i32
    %c0_i32_13 = arith.constant 0 : i32
    %35 = arith.cmpi ne, %34, %c0_i32_13 : i32
    scf.if %35 {
      %c0_14 = arith.constant 0 : index
      %c0_15 = arith.constant 0 : index
      %36 = vector.load %arg12[%c0_14, %c0_15] : memref<1x1xf32, #tpu.memory_space<vmem>>, vector<1x1xf32>
      %c0_16 = arith.constant 0 : index
      %c0_17 = arith.constant 0 : index
      %37 = vector.load %arg13[%c0_16, %c0_17] : memref<1x1xf32, #tpu.memory_space<vmem>>, vector<1x1xf32>
      %cst = arith.constant 1.000000e+00 : f32
      %38 = vector.broadcast %cst : f32 to vector<1x1xf32>
      %39 = arith.maximumf %37, %38 : vector<1x1xf32>
      %40 = arith.divf %36, %39 : vector<1x1xf32>
      %c0_18 = arith.constant 0 : index
      %c0_19 = arith.constant 0 : index
      %41 = vector.load %arg6[%c0_18, %c0_19] : memref<1x1xf32, #tpu.memory_space<vmem>>, vector<1x1xf32>
      tpu.vector_store %arg6[%c0_18, %c0_19], %40 {strides = array<i32>} : memref<1x1xf32, #tpu.memory_space<vmem>>, vector<1x1xf32>,
      %c0_20 = arith.constant 0 : index
      %c0_21 = arith.constant 0 : index
      %42 = vector.load %arg10[%c0_20, %c0_21] : memref<16x32xf32, #tpu.memory_space<vmem>>, vector<16x32xf32>
      %c0_22 = arith.constant 0 : index
      %c0_23 = arith.constant 0 : index
      %43 = vector.load %arg7[%c0_22, %c0_23] : memref<16x32xf32, #tpu.memory_space<vmem>>, vector<16x32xf32>
      tpu.vector_store %arg7[%c0_22, %c0_23], %42 {strides = array<i32>} : memref<16x32xf32, #tpu.memory_space<vmem>>, vector<16x32xf32>,
    } else {
    }
    return
  }
  func.func @transform_0(%arg0: i32, %arg1: i32, %arg2: i32) -> (i32, i32) {
    %c0_i32 = arith.constant 0 : i32
    %c0_i32_0 = arith.constant 0 : i32
    %c0_i32_1 = arith.constant 0 : i32
    return %c0_i32, %c0_i32_0 : i32, i32
  }
  func.func @transform_1(%arg0: i32, %arg1: i32, %arg2: i32) -> (i32, i32) {
    %c1_i32 = arith.constant 1 : i32
    %0 = arith.muli %arg1, %c1_i32 : i32
    %1 = arith.addi %0, %arg2 : i32
    %c0_i32 = arith.constant 0 : i32
    %c0_i32_0 = arith.constant 0 : i32
    return %c0_i32, %1 : i32, i32
  }
  func.func @transform_2(%arg0: i32, %arg1: i32, %arg2: i32) -> (i32, i32, i32) {
    %c0_i32 = arith.constant 0 : i32
    %0 = arith.cmpi eq, %arg0, %c0_i32 : i32
    %c1_i32 = arith.constant 1 : i32
    %1 = arith.select %0, %arg1, %c1_i32 : i32
    %c0_i32_0 = arith.constant 0 : i32
    %2 = arith.cmpi eq, %arg0, %c0_i32_0 : i32
    %c0_i32_1 = arith.constant 0 : i32
    %3 = arith.select %2, %arg2, %c0_i32_1 : i32
    %c0_i32_2 = arith.constant 0 : i32
    %c0_i32_3 = arith.constant 0 : i32
    return %1, %c0_i32_2, %3 : i32, i32, i32
  }
  func.func @transform_3(%arg0: i32, %arg1: i32, %arg2: i32) -> (i32, i32) {
    %c0_i32 = arith.constant 0 : i32
    %c0_i32_0 = arith.constant 0 : i32
    %c0_i32_1 = arith.constant 0 : i32
    return %c0_i32, %c0_i32_0 : i32, i32
  }
  func.func @transform_4(%arg0: i32, %arg1: i32, %arg2: i32) -> (i32, i32) {
    %c0_i32 = arith.constant 0 : i32
    %c0_i32_0 = arith.constant 0 : i32
    %c0_i32_1 = arith.constant 0 : i32
    return %c0_i32, %c0_i32_0 : i32, i32
  }
}

</mosaic_0001>

<llo_original>
// kernel: contrastive_intra_view_lucas_loss.1
$region0: #{contrastive_intra_view_lucas_loss.1}
  #allocation0 [shape = 'u32[]', space=smem, size = 0x4, offset = 0x4, fixed_abs, tag = 'smem constant byte address 0x4 - core index']
  #allocation1 [shape = 'u32[144,128]{1,0:T(1,128)}', space=vmem, size = 0x12000, scoped, tag = 'internal scratch']
  #allocation2 [shape = 'f32[16,32]{1,0:T(8,128)}', space=vmem, size = 0x2000, scoped, tag = 'scratch operand']
  #allocation3 [shape = 'f32[1,16]{1,0:T(1,128)}', space=vmem, size = 0x200, scoped, tag = 'scratch operand']
  #allocation4 [shape = 'f32[16,32]{1,0:T(8,128)}', space=vmem, size = 0x2000, scoped, tag = 'scratch operand']
  #allocation5 [shape = 'f32[16,1]{1,0:T(8,128)}', space=vmem, size = 0x2000, scoped, tag = 'scratch operand']
  #allocation6 [shape = 'f32[1,1]{1,0:T(1,128)}', space=vmem, size = 0x200, scoped, tag = 'scratch operand']
  #allocation7 [shape = 'f32[1,1]{1,0:T(1,128)}', space=vmem, size = 0x200, scoped, tag = 'scratch operand']
  #allocation8 [shape = 'bf16[2,32,1024]{2,1,0:T(16,128)(2,1)}', space=vmem, size = 0x20000, scoped, tag = 'scratch operand']
  %s0 = inlined_call_operand.vmem [shape: f32[16,32], index: 0, kind: input, shape index: {}]
  %s1 = inlined_call_operand.vmem [shape: s32[1,2048], index: 1, kind: input, shape index: {}]
  %s2 = inlined_call_operand.vmem [shape: f32[2,32,1024], index: 2, kind: input, shape index: {}]
  %s3 = inlined_call_operand.hbm [shape: f32[1,1], index: 3, kind: output, shape index: {0}]
  %s4 = inlined_call_operand.hbm [shape: f32[16,32], index: 4, kind: output, shape index: {1}]
  %5 = xla_tuple %s3, %s4
  %s6 = sld [smem:[#allocation0]]
  $region81: #{contrastive_intra_view_lucas_loss.1} parent=0
    _
  %s8 = ssub.s32 1, %s6
  %s9 = scalar_select 0, %s8, %s6
  $region1: #{contrastive_intra_view_lucas_loss.1} parent=0
    #allocation9 [shape = 'u8[512]{0}', space=vmem, size = 0x400, scoped, tag = 'output window, operand 0, single buffered']
    #allocation10 [shape = 's32[2]{0}', space=sflag, size = 0x8, scoped, tag = 'scoped memory for contrastive_intra_view_lucas_loss.1']
    #allocation11 [shape = 'u8[8192]{0}', space=vmem, size = 0x2000, scoped, tag = 'output window, operand 1, single buffered']
    #allocation12 [shape = 's32[1]{0}', space=sflag, size = 0x4, scoped, tag = 'scoped memory for contrastive_intra_view_lucas_loss.1']
    %10 = vsyncpa [#allocation10], 0
    %11 = vsyncpa [#allocation12], 0
    loop: start=0, step=1, limit=8
    $region2: #{contrastive_intra_view_lucas_loss.1} parent=1 // loop_pre_header
      _
    $region3: #{contrastive_intra_view_lucas_loss.1} parent=1 // loop_header
      %s13 = sphi 0, %s17
      %p14 = scmp.ge.s32.totalorder %s13, 8
      %s20 = sphi 0, %s39
      %s21 = sphi 0, %s35
      %s22 = sphi 0, %s31
      %s23 = sphi 0, %s20
      %s24 = sphi 0, %s21
      %s25 = sphi 0, %s22
      %s26 = sphi 0, %s23
      %s27 = sphi 0, %s24
      %s28 = sphi 0, %s25
      %s40 = sphi 0, %s40
      %s42 = sphi 0, %s40
      %s43 = sphi 0, %s42
      %s57 = sphi 0, %s43
      %s65 = sphi 0, %s67
      %s68 = sphi 0, %s65
      %s69 = sphi 0, %s68
      %s85 = sphi 0, %s69
      %s99 = sphi 0, %s101
      %s102 = sphi 0, %s99
      %s103 = sphi 0, %s102
      %s119 = sphi 0, %s103
      %s123 = sphi 0, %s123
      %s125 = sphi 0, %s123
      %s126 = sphi 0, %s125
      %s140 = sphi 0, %s126
      %s144 = sphi 0, %s144
      %s146 = sphi 0, %s144
      %s147 = sphi 0, %s146
      %s161 = sphi 0, %s147
    $region4: #{contrastive_intra_view_lucas_loss.1} parent=1 // loop_header_branch
      %16 = sbr.rel (%p14) target = $region8
    $region5: #{contrastive_intra_view_lucas_loss.1} parent=1 // loop_body
      %s18 = ssub.s32 %s13, 1
      %s19 = ssub.s32 %s13, 2
      %s29 = sadd.s32 1, %s22
      %p30 = scmp.ge.s32.totalorder %s29, 1
      %s31 = scalar_select %p30, 0, %s29
      %s32 = sadd.s32 1, %s21
      %s33 = scalar_select %p30, %s32, %s21
      %p34 = scmp.ge.s32.totalorder %s33, 2
      %s35 = scalar_select %p34, 0, %s33
      %s36 = sadd.s32 1, %s20
      %s37 = scalar_select %p34, %s36, %s20
      %p38 = scmp.ge.s32.totalorder %s37, 3
      %s39 = scalar_select %p38, 0, %s37
      %s41 = sadd.s32 %s40, 1
      %p44 = scmp.eq.s32.totalorder %s13, 5
      %p45 = scmp.ne.s32.totalorder %s40, %s42
      %p46 = scmp.eq.s32.totalorder %s13, 0
      %p47 = por %p45, %p46
      %p48 = scmp.ne.s32.totalorder %s40, %s42
      %p49 = scmp.eq.s32.totalorder %s18, 5
      %p50 = por %p48, %p49
      %p51 = scmp.ne.s32.totalorder %s42, %s43
      %p52 = scmp.eq.s32.totalorder %s18, 0
      %p53 = por %p51, %p52
      %p54 = scmp.ne.s32.totalorder %s42, %s43
      %p55 = scmp.eq.s32.totalorder %s19, 5
      %p56 = por %p54, %p55
      %p58 = scmp.ne.s32.totalorder %s43, %s57
      %p59 = scmp.eq.s32.totalorder %s19, 0
      %p60 = por %p58, %p59
      %s61 = sadd.s32 %s21, %s22
      %s62 = sadd.s32 %s35, %s31
      %s63 = ssub.s32 %s61, %s62
      %p64 = scmp.eq.s32.totalorder %s63, 0
      %s66 = sadd.s32 %s65, 1
      %s67 = scalar_select %p64, %s65, %s66
      %p70 = pneg %p64
      %p71 = scmp.eq.s32.totalorder %s13, 5
      %p72 = por %p70, %p71
      %p73 = scmp.ne.s32.totalorder %s65, %s68
      %p74 = scmp.eq.s32.totalorder %s13, 0
      %p75 = por %p73, %p74
      %p76 = scmp.ne.s32.totalorder %s65, %s68
      %p77 = scmp.eq.s32.totalorder %s18, 5
      %p78 = por %p76, %p77
      %p79 = scmp.ne.s32.totalorder %s68, %s69
      %p80 = scmp.eq.s32.totalorder %s18, 0
      %p81 = por %p79, %p80
      %p82 = scmp.ne.s32.totalorder %s68, %s69
      %p83 = scmp.eq.s32.totalorder %s19, 5
      %p84 = por %p82, %p83
      %p86 = scmp.ne.s32.totalorder %s69, %s85
      %p87 = scmp.eq.s32.totalorder %s19, 0
      %p88 = por %p86, %p87
      %p89 = scmp.eq.s32.totalorder %s20, 0
      %s90 = scalar_select %p89, %s21, 1
      %s91 = scalar_select %p89, %s22, 0
      %p92 = scmp.eq.s32.totalorder %s39, 0
      %s93 = scalar_select %p92, %s35, 1
      %s94 = scalar_select %p92, %s31, 0
      %s95 = ssub.s32 %s90, %s93
      %s96 = ssub.s32 %s91, %s94
      %s97 = sor.u32 %s95, %s96
      %p98 = scmp.eq.s32.totalorder %s97, 0
      %s100 = sadd.s32 %s99, 1
      %s101 = scalar_select %p98, %s99, %s100
      %p104 = pneg %p98
      %p105 = scmp.eq.s32.totalorder %s13, 5
      %p106 = por %p104, %p105
      %p107 = scmp.ne.s32.totalorder %s99, %s102
      %p108 = scmp.eq.s32.totalorder %s13, 0
      %p109 = por %p107, %p108
      %p110 = scmp.ne.s32.totalorder %s99, %s102
      %p111 = scmp.eq.s32.totalorder %s18, 5
      %p112 = por %p110, %p111
      %p113 = scmp.ne.s32.totalorder %s102, %s103
      %p114 = scmp.eq.s32.totalorder %s18, 0
      %p115 = por %p113, %p114
      %p116 = scmp.ne.s32.totalorder %s102, %s103
      %p117 = scmp.eq.s32.totalorder %s19, 5
      %p118 = por %p116, %p117
      %p120 = scmp.ne.s32.totalorder %s103, %s119
      %p121 = scmp.eq.s32.totalorder %s19, 0
      %p122 = por %p120, %p121
      %s124 = sadd.s32 %s123, 1
      %p127 = scmp.eq.s32.totalorder %s13, 5
      %p128 = scmp.ne.s32.totalorder %s123, %s125
      %p129 = scmp.eq.s32.totalorder %s13, 0
      %p130 = por %p128, %p129
      %p131 = scmp.ne.s32.totalorder %s123, %s125
      %p132 = scmp.eq.s32.totalorder %s18, 5
      %p133 = por %p131, %p132
      %p134 = scmp.ne.s32.totalorder %s125, %s126
      %p135 = scmp.eq.s32.totalorder %s18, 0
      %p136 = por %p134, %p135
      %p137 = scmp.ne.s32.totalorder %s125, %s126
      %p138 = scmp.eq.s32.totalorder %s19, 5
      %p139 = por %p137, %p138
      %p141 = scmp.ne.s32.totalorder %s126, %s140
      %p142 = scmp.eq.s32.totalorder %s19, 0
      %p143 = por %p141, %p142
      %s145 = sadd.s32 %s144, 1
      %p148 = scmp.eq.s32.totalorder %s13, 5
      %p149 = scmp.ne.s32.totalorder %s144, %s146
      %p150 = scmp.eq.s32.totalorder %s13, 0
      %p151 = por %p149, %p150
      %p152 = scmp.ne.s32.totalorder %s144, %s146
      %p153 = scmp.eq.s32.totalorder %s18, 5
      %p154 = por %p152, %p153
      %p155 = scmp.ne.s32.totalorder %s146, %s147
      %p156 = scmp.eq.s32.totalorder %s18, 0
      %p157 = por %p155, %p156
      %p158 = scmp.ne.s32.totalorder %s146, %s147
      %p159 = scmp.eq.s32.totalorder %s19, 5
      %p160 = por %p158, %p159
      %p162 = scmp.ne.s32.totalorder %s147, %s161
      %p163 = scmp.eq.s32.totalorder %s19, 0
      %p164 = por %p162, %p163
      %p165 = scmp.le.s32.totalorder 1, %s13
      %p166 = scmp.lt.s32.totalorder %s13, 7
      %p167 = pnand %p165, %p166
      %p168 = pneg %p167
      // Predicated region
      $region9: #{contrastive_intra_view_lucas_loss.1} parent=5 // pred_check
        _
      $region10: #{contrastive_intra_view_lucas_loss.1} parent=5 // pred_check_branch
        %170 = sbr.rel (%p167) target = $region12
      $region11: #{contrastive_intra_view_lucas_loss.1} parent=5 // pred_region
        %s171 = ssub.s32 %s13, 1
        // Predicated region
        $region13: #{contrastive_intra_view_lucas_loss.1} parent=11 // pred_check
          %p172 = pneg %p53
        $region14: #{contrastive_intra_view_lucas_loss.1} parent=11 // pred_check_branch
          %174 = sbr.rel (%p172) target = $region16
        $region15: #{contrastive_intra_view_lucas_loss.1} parent=11 // pred_region
          _
        $region16: #{contrastive_intra_view_lucas_loss.1} parent=11 // pred_fallthru
          _
      $region12: #{contrastive_intra_view_lucas_loss.1} parent=5 // pred_fallthru
        _
      %p175 = scmp.lt.s32.totalorder %s13, 6
      // Predicated region
      $region17: #{contrastive_intra_view_lucas_loss.1} parent=5 // pred_check
        %p176 = pneg %p175
      $region18: #{contrastive_intra_view_lucas_loss.1} parent=5 // pred_check_branch
        %178 = sbr.rel (%p176) target = $region20
      $region19: #{contrastive_intra_view_lucas_loss.1} parent=5 // pred_region
        // Predicated region
        $region21: #{contrastive_intra_view_lucas_loss.1} parent=19 // pred_check
          %p179 = pneg %p75
        $region22: #{contrastive_intra_view_lucas_loss.1} parent=19 // pred_check_branch
          %181 = sbr.rel (%p179) target = $region24
        $region23: #{contrastive_intra_view_lucas_loss.1} parent=19 // pred_region
          %s182 = sadd.s32 %s21, %s22
          %s183 = smul.u32 8, %s182
          %p184 = scmp.lt.s32.totalorder %s183, 15
          %s185 = scalar_select %p184, %s183, 15
          %s186 = scalar_lea.vmem %s1, %s185
          %s187 = sadd.s32 %s21, %s22
          %s188 = smul.u32 8, %s187
        $region24: #{contrastive_intra_view_lucas_loss.1} parent=19 // pred_fallthru
          _
        // Predicated region
        $region25: #{contrastive_intra_view_lucas_loss.1} parent=19 // pred_check
          %p189 = pneg %p109
        $region26: #{contrastive_intra_view_lucas_loss.1} parent=19 // pred_check_branch
          %191 = sbr.rel (%p189) target = $region28
        $region27: #{contrastive_intra_view_lucas_loss.1} parent=19 // pred_region
          %p192 = scmp.eq.s32.totalorder %s20, 0
          %s193 = scalar_select %p192, %s21, 1
          %s194 = scalar_select %p192, %s22, 0
          %s195 = smul.u32 8, %s194
          %p196 = scmp.lt.s32.totalorder %s193, 1
          %s197 = scalar_select %p196, %s193, 1
          %p198 = scmp.lt.s32.totalorder %s195, 7
          %s199 = scalar_select %p198, %s195, 7
          %s200 = smul.addr %s197, 32
          %s201 = sadd.s32 %s199, %s200
          %s202 = smul.addr %s201, 8
          %s203 = scalar_lea.vmem %s2, %s202
          %p204 = scmp.eq.s32.totalorder %s20, 0
          %s205 = scalar_select %p204, %s21, 1
          %s206 = scalar_select %p204, %s22, 0
          %s207 = smul.u32 8, %s206
        $region28: #{contrastive_intra_view_lucas_loss.1} parent=19 // pred_fallthru
          _
      $region20: #{contrastive_intra_view_lucas_loss.1} parent=5 // pred_fallthru
        _
      %p208 = scmp.le.s32.totalorder 1, %s13
      %p209 = scmp.lt.s32.totalorder %s13, 7
      %p210 = pnand %p208, %p209
      %p211 = pneg %p210
      // Predicated region
      $region29: #{contrastive_intra_view_lucas_loss.1} parent=5 // pred_check
        _
      $region30: #{contrastive_intra_view_lucas_loss.1} parent=5 // pred_check_branch
        %213 = sbr.rel (%p210) target = $region32
      $region31: #{contrastive_intra_view_lucas_loss.1} parent=5 // pred_region
        %s214 = ssub.s32 %s13, 1
        %p215 = pneg %p53
        %p216 = pneg %p50
        %s217 = sadd.s32 %s24, %s25
        %s218 = smul.u32 8, %s217
        %p219 = scmp.lt.s32.totalorder %s218, 15
        %s220 = scalar_select %p219, %s218, 15
        %s221 = scalar_lea.vmem %s1, %s220
        %p222 = pneg %p81
        %p223 = pneg %p78
        %p224 = scmp.eq.s32.totalorder %s23, 0
        %s225 = scalar_select %p224, %s24, 1
        %s226 = scalar_select %p224, %s25, 0
        %s227 = smul.u32 8, %s226
        %p228 = scmp.lt.s32.totalorder %s225, 1
        %s229 = scalar_select %p228, %s225, 1
        %p230 = scmp.lt.s32.totalorder %s227, 7
        %s231 = scalar_select %p230, %s227, 7
        %s232 = smul.addr %s229, 32
        %s233 = sadd.s32 %s231, %s232
        %s234 = smul.addr %s233, 8
        %s235 = scalar_lea.vmem %s2, %s234
        %p236 = pneg %p115
        %p237 = pneg %p112
        %p238 = pneg %p136
        %p239 = pneg %p133
        %p240 = pneg %p157
        %p241 = pneg %p154
        %s242 = sadd.s32 %s24, %s25
        %s243 = smul.u32 8, %s242
        %p244 = scmp.lt.s32.totalorder %s243, 15
        %s245 = scalar_select %p244, %s243, 15
        %s246 = scalar_lea.vmem %s1, %s245
        %s247 = sadd.s32 %s24, %s25
        %s248 = smul.u32 8, %s247
        %p249 = scmp.eq.s32.totalorder %s23, 0
        %s250 = scalar_select %p249, %s24, 1
        %s251 = scalar_select %p249, %s25, 0
        %s252 = smul.u32 8, %s251
        %p253 = scmp.lt.s32.totalorder %s250, 1
        %s254 = scalar_select %p253, %s250, 1
        %p255 = scmp.lt.s32.totalorder %s252, 7
        %s256 = scalar_select %p255, %s252, 7
        %s257 = smul.addr %s254, 32
        %s258 = sadd.s32 %s256, %s257
        %s259 = smul.addr %s258, 8
        %s260 = scalar_lea.vmem %s2, %s259
        %p261 = scmp.eq.s32.totalorder %s23, 0
        %s262 = scalar_select %p261, %s24, 1
        %s263 = scalar_select %p261, %s25, 0
        %s264 = smul.u32 8, %s263
        %v266 = vld [vmem:[%s246] sm:$0xff]
        %vm267 = vcmp.ne.s32.totalorder %v266, 255
        %v268 = vsel %vm267, 1, 0
        %v269 = vcvt.s32.f32 %v268
        %v270 = vlaneseq
        %v271 = vshrl.u32 %v270, 7
        %v272 = vadd.s32 %v271, 8
        %vm273 = vcmp.lt.s32.totalorder %v271, 9
        %vm274 = vcmp.lt.s32.totalorder %v272, 9
        %p275 = scmp.eq.s32.totalorder %s24, 0
        %p276 = scmp.eq.s32.totalorder %s25, 0
        %p277 = pnand %p275, %p276
        %p278 = pneg %p277
        %p279 = scmp.eq.s32.totalorder %s24, 1
        %p280 = pnand %p279, %p276
        %p281 = pneg %p280
        %p282 = scmp.eq.s32.totalorder %s23, 0
        // Predicated region
        $region33: #{contrastive_intra_view_lucas_loss.1} parent=31 // pred_check
          %p283 = pneg %p282
        $region34: #{contrastive_intra_view_lucas_loss.1} parent=31 // pred_check_branch
          %285 = sbr.rel (%p283) target = $region36
        $region35: #{contrastive_intra_view_lucas_loss.1} parent=31 // pred_region
          // Predicated region
          $region37: #{contrastive_intra_view_lucas_loss.1} parent=35 // pred_check
            _
          $region38: #{contrastive_intra_view_lucas_loss.1} parent=35 // pred_check_branch
            %287 = sbr.rel (%p277) target = $region40
          $region39: #{contrastive_intra_view_lucas_loss.1} parent=35 // pred_region
            %vm288 = vcmask 261120
            %289 = vst.msk [vmem:[#allocation2] sm:$0xff] %vm288, 0.0
            %290 = vst.msk [vmem:[#allocation2 + $0x8] sm:$0xff] %vm288, 0.0
            %vm291 = vcmask 122880
            %292 = vst.msk [vmem:[#allocation3] sm:$0x1] %vm291, 0.0
          $region40: #{contrastive_intra_view_lucas_loss.1} parent=35 // pred_fallthru
            _
          %v293 = vld [vmem:[%s260] sm:$0xff]
          %v294 = vld [vmem:[%s260 + $0x8] sm:$0xff]
          %v295 = vld [vmem:[%s260 + $0x10] sm:$0xff]
          %v296 = vld [vmem:[%s260 + $0x18] sm:$0xff]
          %v297 = vld [vmem:[%s260 + $0x20] sm:$0xff]
          %v298 = vld [vmem:[%s260 + $0x28] sm:$0xff]
          %v299 = vld [vmem:[%s260 + $0x30] sm:$0xff]
          %v300 = vld [vmem:[%s260 + $0x38] sm:$0xff]
          %v301 = vld [vmem:[%s260 + $0x40] sm:$0xff]
          %v302 = vld [vmem:[%s260 + $0x48] sm:$0xff]
          %v303 = vld [vmem:[%s260 + $0x50] sm:$0xff]
          %v304 = vld [vmem:[%s260 + $0x58] sm:$0xff]
          %v305 = vld [vmem:[%s260 + $0x60] sm:$0xff]
          %v306 = vld [vmem:[%s260 + $0x68] sm:$0xff]
          %v307 = vld [vmem:[%s260 + $0x70] sm:$0xff]
          %v308 = vld [vmem:[%s260 + $0x78] sm:$0xff]
          %v309 = vld [vmem:[%s260 + $0x80] sm:$0xff]
          %v310 = vld [vmem:[%s260 + $0x88] sm:$0xff]
          %v311 = vld [vmem:[%s260 + $0x90] sm:$0xff]
          %v312 = vld [vmem:[%s260 + $0x98] sm:$0xff]
          %v313 = vld [vmem:[%s260 + $0xa0] sm:$0xff]
          %v314 = vld [vmem:[%s260 + $0xa8] sm:$0xff]
          %v315 = vld [vmem:[%s260 + $0xb0] sm:$0xff]
          %v316 = vld [vmem:[%s260 + $0xb8] sm:$0xff]
          %v317 = vld [vmem:[%s260 + $0xc0] sm:$0xff]
          %v318 = vld [vmem:[%s260 + $0xc8] sm:$0xff]
          %v319 = vld [vmem:[%s260 + $0xd0] sm:$0xff]
          %v320 = vld [vmem:[%s260 + $0xd8] sm:$0xff]
          %v321 = vld [vmem:[%s260 + $0xe0] sm:$0xff]
          %v322 = vld [vmem:[%s260 + $0xe8] sm:$0xff]
          %v323 = vld [vmem:[%s260 + $0xf0] sm:$0xff]
          %v324 = vld [vmem:[%s260 + $0xf8] sm:$0xff]
          %v325 = vpack.c.bf16 %v301, %v293
          %v326 = vpack.c.bf16 %v302, %v294
          %v327 = vpack.c.bf16 %v303, %v295
          %v328 = vpack.c.bf16 %v304, %v296
          %v329 = vpack.c.bf16 %v305, %v297
          %v330 = vpack.c.bf16 %v306, %v298
          %v331 = vpack.c.bf16 %v307, %v299
          %v332 = vpack.c.bf16 %v308, %v300
          %v333 = vpack.c.bf16 %v317, %v309
          %v334 = vpack.c.bf16 %v318, %v310
          %v335 = vpack.c.bf16 %v319, %v311
          %v336 = vpack.c.bf16 %v320, %v312
          %v337 = vpack.c.bf16 %v321, %v313
          %v338 = vpack.c.bf16 %v322, %v314
          %v339 = vpack.c.bf16 %v323, %v315
          %v340 = vpack.c.bf16 %v324, %v316
          %s341 = sadd.s32 %s24, %s25
          %s342 = smul.u32 %s341, 16
          %s343 = smul.addr %s342, 8
          %s344 = scalar_lea.vmem [#allocation8], %s343
          %345 = vst [vmem:[%s344] sm:$0xff] %v325
          %346 = vst [vmem:[%s344 + $0x8] sm:$0xff] %v326
          %347 = vst [vmem:[%s344 + $0x10] sm:$0xff] %v327
          %348 = vst [vmem:[%s344 + $0x18] sm:$0xff] %v328
          %349 = vst [vmem:[%s344 + $0x20] sm:$0xff] %v329
          %350 = vst [vmem:[%s344 + $0x28] sm:$0xff] %v330
          %351 = vst [vmem:[%s344 + $0x30] sm:$0xff] %v331
          %352 = vst [vmem:[%s344 + $0x38] sm:$0xff] %v332
          %353 = vst [vmem:[%s344 + $0x40] sm:$0xff] %v333
          %354 = vst [vmem:[%s344 + $0x48] sm:$0xff] %v334
          %355 = vst [vmem:[%s344 + $0x50] sm:$0xff] %v335
          %356 = vst [vmem:[%s344 + $0x58] sm:$0xff] %v336
          %357 = vst [vmem:[%s344 + $0x60] sm:$0xff] %v337
          %358 = vst [vmem:[%s344 + $0x68] sm:$0xff] %v338
          %359 = vst [vmem:[%s344 + $0x70] sm:$0xff] %v339
          %360 = vst [vmem:[%s344 + $0x78] sm:$0xff] %v340
          %v361 = vlaneseq
          %v362 = vshrl.u32 %v361, 7
          %v363 = vsub.s32 0, %v362
          %v364 = vrot.slane %v266, %v363
          %v365 = vlaneseq
          %v366 = vshrl.u32 %v365, 7
          %v367 = vsub.s32 1, %v366
          %v368 = vrot.slane %v266, %v367
          %v369 = vlaneseq
          %v370 = vshrl.u32 %v369, 7
          %v371 = vsub.s32 2, %v370
          %v372 = vrot.slane %v266, %v371
          %v373 = vlaneseq
          %v374 = vshrl.u32 %v373, 7
          %v375 = vsub.s32 3, %v374
          %v376 = vrot.slane %v266, %v375
          %v377 = vlaneseq
          %v378 = vshrl.u32 %v377, 7
          %v379 = vsub.s32 4, %v378
          %v380 = vrot.slane %v266, %v379
          %v381 = vlaneseq
          %v382 = vshrl.u32 %v381, 7
          %v383 = vsub.s32 5, %v382
          %v384 = vrot.slane %v266, %v383
          %v385 = vlaneseq
          %v386 = vshrl.u32 %v385, 7
          %v387 = vsub.s32 6, %v386
          %v388 = vrot.slane %v266, %v387
          %v389 = vlaneseq
          %v390 = vshrl.u32 %v389, 7
          %v391 = vsub.s32 7, %v390
          %v392 = vrot.slane %v266, %v391
          %vm393 = vcmp.eq.s32.totalorder %v271, %v364
          %vm394 = vcmp.eq.s32.totalorder %v271, %v368
          %vm395 = vcmp.eq.s32.totalorder %v271, %v372
          %vm396 = vcmp.eq.s32.totalorder %v271, %v376
          %vm397 = vcmp.eq.s32.totalorder %v271, %v380
          %vm398 = vcmp.eq.s32.totalorder %v271, %v384
          %vm399 = vcmp.eq.s32.totalorder %v271, %v388
          %vm400 = vcmp.eq.s32.totalorder %v271, %v392
          %vm401 = vcmp.eq.s32.totalorder %v272, %v364
          %vm402 = vcmp.eq.s32.totalorder %v272, %v368
          %vm403 = vcmp.eq.s32.totalorder %v272, %v372
          %vm404 = vcmp.eq.s32.totalorder %v272, %v376
          %vm405 = vcmp.eq.s32.totalorder %v272, %v380
          %vm406 = vcmp.eq.s32.totalorder %v272, %v384
          %vm407 = vcmp.eq.s32.totalorder %v272, %v388
          %vm408 = vcmp.eq.s32.totalorder %v272, %v392
          %v409 = vsel %vm393, 1, 0
          %v410 = vsel %vm394, 1, 0
          %v411 = vsel %vm395, 1, 0
          %v412 = vsel %vm396, 1, 0
          %v413 = vsel %vm397, 1, 0
          %v414 = vsel %vm398, 1, 0
          %v415 = vsel %vm399, 1, 0
          %v416 = vsel %vm400, 1, 0
          %v417 = vsel %vm401, 1, 0
          %v418 = vsel %vm402, 1, 0
          %v419 = vsel %vm403, 1, 0
          %v420 = vsel %vm404, 1, 0
          %v421 = vsel %vm405, 1, 0
          %v422 = vsel %vm406, 1, 0
          %v423 = vsel %vm407, 1, 0
          %v424 = vsel %vm408, 1, 0
          %v425 = vcvt.s32.f32 %v409
          %v426 = vcvt.s32.f32 %v410
          %v427 = vcvt.s32.f32 %v411
          %v428 = vcvt.s32.f32 %v412
          %v429 = vcvt.s32.f32 %v413
          %v430 = vcvt.s32.f32 %v414
          %v431 = vcvt.s32.f32 %v415
          %v432 = vcvt.s32.f32 %v416
          %v433 = vcvt.s32.f32 %v417
          %v434 = vcvt.s32.f32 %v418
          %v435 = vcvt.s32.f32 %v419
          %v436 = vcvt.s32.f32 %v420
          %v437 = vcvt.s32.f32 %v421
          %v438 = vcvt.s32.f32 %v422
          %v439 = vcvt.s32.f32 %v423
          %v440 = vcvt.s32.f32 %v424
          %v442 = vlaneseq
          %v443 = vshrl.u32 %v442, 7
          %v444 = vsub.s32 0, %v443
          %v445 = vrot.slane %v269, %v444
          %v446 = vlaneseq
          %v447 = vshrl.u32 %v446, 7
          %v448 = vsub.s32 1, %v447
          %v449 = vrot.slane %v269, %v448
          %v450 = vlaneseq
          %v451 = vshrl.u32 %v450, 7
          %v452 = vsub.s32 2, %v451
          %v453 = vrot.slane %v269, %v452
          %v454 = vlaneseq
          %v455 = vshrl.u32 %v454, 7
          %v456 = vsub.s32 3, %v455
          %v457 = vrot.slane %v269, %v456
          %v458 = vlaneseq
          %v459 = vshrl.u32 %v458, 7
          %v460 = vsub.s32 4, %v459
          %v461 = vrot.slane %v269, %v460
          %v462 = vlaneseq
          %v463 = vshrl.u32 %v462, 7
          %v464 = vsub.s32 5, %v463
          %v465 = vrot.slane %v269, %v464
          %v466 = vlaneseq
          %v467 = vshrl.u32 %v466, 7
          %v468 = vsub.s32 6, %v467
          %v469 = vrot.slane %v269, %v468
          %v470 = vlaneseq
          %v471 = vshrl.u32 %v470, 7
          %v472 = vsub.s32 7, %v471
          %v473 = vrot.slane %v269, %v472
          %v482 = vmul.f32 %v425, %v445
          %v483 = vmul.f32 %v426, %v449
          %v484 = vmul.f32 %v427, %v453
          %v485 = vmul.f32 %v428, %v457
          %v486 = vmul.f32 %v429, %v461
          %v487 = vmul.f32 %v430, %v465
          %v488 = vmul.f32 %v431, %v469
          %v489 = vmul.f32 %v432, %v473
          %v490 = vmul.f32 %v433, %v445
          %v491 = vmul.f32 %v434, %v449
          %v492 = vmul.f32 %v435, %v453
          %v493 = vmul.f32 %v436, %v457
          %v494 = vmul.f32 %v437, %v461
          %v495 = vmul.f32 %v438, %v465
          %v496 = vmul.f32 %v439, %v469
          %v497 = vmul.f32 %v440, %v473
          %v498 = vpack.c.bf16 %v490, %v482
          %v499 = vpack.c.bf16 %v491, %v483
          %v500 = vpack.c.bf16 %v492, %v484
          %v501 = vpack.c.bf16 %v493, %v485
          %v502 = vpack.c.bf16 %v494, %v486
          %v503 = vpack.c.bf16 %v495, %v487
          %v504 = vpack.c.bf16 %v496, %v488
          %v505 = vpack.c.bf16 %v497, %v489
          %v506 = vld [vmem:[#allocation2] sm:$0xff]
          %v507 = vld [vmem:[#allocation2 + $0x8] sm:$0xff]
          %508 = vmatprep.subr.bf16.mxu0 %v326
          %509 = vmatpush1.bf16.xpose.msra.mxu0 %v325
          %510 = vmatprep.subr.bf16.mxu0 %v334
          %511 = vmatpush1.bf16.xpose.msra.mxu0 %v333
          %512 = vmatprep.subr.bf16.mxu0 0
          %513 = vmatpush1.bf16.xpose.msra.mxu0 0
          %514 = vmatprep.subr.bf16.mxu0 0
          %515 = vmatpush1.bf16.xpose.msra.mxu0 0
          %516 = vmatprep.subr.bf16.mxu0 0
          %517 = vmatpush1.bf16.xpose.msra.mxu0 0
          %518 = vmatprep.subr.bf16.mxu0 0
          %519 = vmatpush1.bf16.xpose.msra.mxu0 0
          %520 = vmatprep.subr.bf16.mxu0 0
          %521 = vmatpush1.bf16.xpose.msra.mxu0 0
          %522 = vmatprep.subr.bf16.mxu0 0
          %523 = vmatpush1.bf16.xpose.msra.mxu0 0
          %524 = vmatprep.subr.bf16.mxu0 0
          %525 = vmatpush1.bf16.xpose.msra.mxu0 0
          %526 = vmatprep.subr.bf16.mxu0 0
          %527 = vmatpush1.bf16.xpose.msra.mxu0 0
          %528 = vmatprep.subr.bf16.mxu0 0
          %529 = vmatpush1.bf16.xpose.msra.mxu0 0
          %530 = vmatprep.subr.bf16.mxu0 0
          %531 = vmatpush1.bf16.xpose.msra.mxu0 0
          %532 = vmatprep.subr.bf16.mxu0 0
          %533 = vmatpush1.bf16.xpose.msra.mxu0 0
          %534 = vmatprep.subr.bf16.mxu0 0
          %535 = vmatpush1.bf16.xpose.msra.mxu0 0
          %536 = vmatprep.subr.bf16.mxu0 0
          %537 = vmatpush1.bf16.xpose.msra.mxu0 0
          %538 = vmatprep.subr.bf16.mxu0 0
          %539 = vmatpush1.bf16.xpose.msra.mxu0 0
          %540 = vmatprep.mubr.bf16.mxu0 %v499
          %541 = vmatmul.mubr.bf16.gmra.mrb[0].mxu0 %v498
          %v542 = vpop.f32.mrb[0].mxu0
          %v543 = vadd.f32 0.0, %v542
          %v544 = vpop.f32.mrb[0].mxu0
          %v545 = vpop.f32.mrb[0].mxu0
          %v546 = vadd.f32 0.0, %v545
          %v547 = vpop.f32.mrb[0].mxu0
          %548 = vdwg.mxu0
          %549 = vmatprep.subr.bf16.mxu0 %v328
          %550 = vmatpush1.bf16.xpose.msra.mxu0 %v327
          %551 = vmatprep.subr.bf16.mxu0 %v336
          %552 = vmatpush1.bf16.xpose.msra.mxu0 %v335
          %553 = vmatprep.subr.bf16.mxu0 0
          %554 = vmatpush1.bf16.xpose.msra.mxu0 0
          %555 = vmatprep.subr.bf16.mxu0 0
          %556 = vmatpush1.bf16.xpose.msra.mxu0 0
          %557 = vmatprep.subr.bf16.mxu0 0
          %558 = vmatpush1.bf16.xpose.msra.mxu0 0
          %559 = vmatprep.subr.bf16.mxu0 0
          %560 = vmatpush1.bf16.xpose.msra.mxu0 0
          %561 = vmatprep.subr.bf16.mxu0 0
          %562 = vmatpush1.bf16.xpose.msra.mxu0 0
          %563 = vmatprep.subr.bf16.mxu0 0
          %564 = vmatpush1.bf16.xpose.msra.mxu0 0
          %565 = vmatprep.subr.bf16.mxu0 0
          %566 = vmatpush1.bf16.xpose.msra.mxu0 0
          %567 = vmatprep.subr.bf16.mxu0 0
          %568 = vmatpush1.bf16.xpose.msra.mxu0 0
          %569 = vmatprep.subr.bf16.mxu0 0
          %570 = vmatpush1.bf16.xpose.msra.mxu0 0
          %571 = vmatprep.subr.bf16.mxu0 0
          %572 = vmatpush1.bf16.xpose.msra.mxu0 0
          %573 = vmatprep.subr.bf16.mxu0 0
          %574 = vmatpush1.bf16.xpose.msra.mxu0 0
          %575 = vmatprep.subr.bf16.mxu0 0
          %576 = vmatpush1.bf16.xpose.msra.mxu0 0
          %577 = vmatprep.subr.bf16.mxu0 0
          %578 = vmatpush1.bf16.xpose.msra.mxu0 0
          %579 = vmatprep.subr.bf16.mxu0 0
          %580 = vmatpush1.bf16.xpose.msra.mxu0 0
          %581 = vmatprep.mubr.bf16.mxu0 %v501
          %582 = vmatmul.mubr.bf16.gmra.mrb[0].mxu0 %v500
          %v583 = vpop.f32.mrb[0].mxu0
          %v584 = vadd.f32 %v543, %v583
          %v585 = vpop.f32.mrb[0].mxu0
          %v586 = vpop.f32.mrb[0].mxu0
          %v587 = vadd.f32 %v546, %v586
          %v588 = vpop.f32.mrb[0].mxu0
          %589 = vdwg.mxu0
          %590 = vmatprep.subr.bf16.mxu0 %v330
          %591 = vmatpush1.bf16.xpose.msra.mxu0 %v329
          %592 = vmatprep.subr.bf16.mxu0 %v338
          %593 = vmatpush1.bf16.xpose.msra.mxu0 %v337
          %594 = vmatprep.subr.bf16.mxu0 0
          %595 = vmatpush1.bf16.xpose.msra.mxu0 0
          %596 = vmatprep.subr.bf16.mxu0 0
          %597 = vmatpush1.bf16.xpose.msra.mxu0 0
          %598 = vmatprep.subr.bf16.mxu0 0
          %599 = vmatpush1.bf16.xpose.msra.mxu0 0
          %600 = vmatprep.subr.bf16.mxu0 0
          %601 = vmatpush1.bf16.xpose.msra.mxu0 0
          %602 = vmatprep.subr.bf16.mxu0 0
          %603 = vmatpush1.bf16.xpose.msra.mxu0 0
          %604 = vmatprep.subr.bf16.mxu0 0
          %605 = vmatpush1.bf16.xpose.msra.mxu0 0
          %606 = vmatprep.subr.bf16.mxu0 0
          %607 = vmatpush1.bf16.xpose.msra.mxu0 0
          %608 = vmatprep.subr.bf16.mxu0 0
          %609 = vmatpush1.bf16.xpose.msra.mxu0 0
          %610 = vmatprep.subr.bf16.mxu0 0
          %611 = vmatpush1.bf16.xpose.msra.mxu0 0
          %612 = vmatprep.subr.bf16.mxu0 0
          %613 = vmatpush1.bf16.xpose.msra.mxu0 0
          %614 = vmatprep.subr.bf16.mxu0 0
          %615 = vmatpush1.bf16.xpose.msra.mxu0 0
          %616 = vmatprep.subr.bf16.mxu0 0
          %617 = vmatpush1.bf16.xpose.msra.mxu0 0
          %618 = vmatprep.subr.bf16.mxu0 0
          %619 = vmatpush1.bf16.xpose.msra.mxu0 0
          %620 = vmatprep.subr.bf16.mxu0 0
          %621 = vmatpush1.bf16.xpose.msra.mxu0 0
          %622 = vmatprep.mubr.bf16.mxu0 %v503
          %623 = vmatmul.mubr.bf16.gmra.mrb[0].mxu0 %v502
          %v624 = vpop.f32.mrb[0].mxu0
          %v625 = vadd.f32 %v584, %v624
          %v626 = vpop.f32.mrb[0].mxu0
          %v627 = vpop.f32.mrb[0].mxu0
          %v628 = vadd.f32 %v587, %v627
          %v629 = vpop.f32.mrb[0].mxu0
          %630 = vdwg.mxu0
          %631 = vmatprep.subr.bf16.mxu0 %v332
          %632 = vmatpush1.bf16.xpose.msra.mxu0 %v331
          %633 = vmatprep.subr.bf16.mxu0 %v340
          %634 = vmatpush1.bf16.xpose.msra.mxu0 %v339
          %635 = vmatprep.subr.bf16.mxu0 0
          %636 = vmatpush1.bf16.xpose.msra.mxu0 0
          %637 = vmatprep.subr.bf16.mxu0 0
          %638 = vmatpush1.bf16.xpose.msra.mxu0 0
          %639 = vmatprep.subr.bf16.mxu0 0
          %640 = vmatpush1.bf16.xpose.msra.mxu0 0
          %641 = vmatprep.subr.bf16.mxu0 0
          %642 = vmatpush1.bf16.xpose.msra.mxu0 0
          %643 = vmatprep.subr.bf16.mxu0 0
          %644 = vmatpush1.bf16.xpose.msra.mxu0 0
          %645 = vmatprep.subr.bf16.mxu0 0
          %646 = vmatpush1.bf16.xpose.msra.mxu0 0
          %647 = vmatprep.subr.bf16.mxu0 0
          %648 = vmatpush1.bf16.xpose.msra.mxu0 0
          %649 = vmatprep.subr.bf16.mxu0 0
          %650 = vmatpush1.bf16.xpose.msra.mxu0 0
          %651 = vmatprep.subr.bf16.mxu0 0
          %652 = vmatpush1.bf16.xpose.msra.mxu0 0
          %653 = vmatprep.subr.bf16.mxu0 0
          %654 = vmatpush1.bf16.xpose.msra.mxu0 0
          %655 = vmatprep.subr.bf16.mxu0 0
          %656 = vmatpush1.bf16.xpose.msra.mxu0 0
          %657 = vmatprep.subr.bf16.mxu0 0
          %658 = vmatpush1.bf16.xpose.msra.mxu0 0
          %659 = vmatprep.subr.bf16.mxu0 0
          %660 = vmatpush1.bf16.xpose.msra.mxu0 0
          %661 = vmatprep.subr.bf16.mxu0 0
          %662 = vmatpush1.bf16.xpose.msra.mxu0 0
          %663 = vmatprep.mubr.bf16.mxu0 %v505
          %664 = vmatmul.mubr.bf16.gmra.mrb[0].mxu0 %v504
          %v665 = vpop.f32.mrb[0].mxu0
          %v666 = vadd.f32 %v625, %v665
          %v667 = vpop.f32.mrb[0].mxu0
          %v668 = vpop.f32.mrb[0].mxu0
          %v669 = vadd.f32 %v628, %v668
          %v670 = vpop.f32.mrb[0].mxu0
          %671 = vdwg.mxu0
          %v672 = vadd.f32 %v506, %v666
          %v673 = vadd.f32 %v507, %v669
          %vm674 = vcmask 261120
          %675 = vst.msk [vmem:[#allocation2] sm:$0xff] %vm674, %v672
          %676 = vst.msk [vmem:[#allocation2 + $0x8] sm:$0xff] %vm674, %v673
          %v677 = vld [vmem:[#allocation3] sm:$0x1]
          %v678 = vpack.c.bf16 %v445, %v445
          %v679 = vpack.c.bf16 %v449, %v449
          %v680 = vpack.c.bf16 %v453, %v453
          %v681 = vpack.c.bf16 %v457, %v457
          %v682 = vpack.c.bf16 %v461, %v461
          %v683 = vpack.c.bf16 %v465, %v465
          %v684 = vpack.c.bf16 %v469, %v469
          %v685 = vpack.c.bf16 %v473, %v473
          %686 = vmatprep.subr.bf16.mxu0 %v499
          %687 = vmatpush1.bf16.xpose.msra.mxu0 %v498
          %688 = vmatprep.subr.bf16.mxu0 0
          %689 = vmatpush1.bf16.xpose.msra.mxu0 0
          %690 = vmatprep.subr.bf16.mxu0 0
          %691 = vmatpush1.bf16.xpose.msra.mxu0 0
          %692 = vmatprep.subr.bf16.mxu0 0
          %693 = vmatpush1.bf16.xpose.msra.mxu0 0
          %694 = vmatprep.subr.bf16.mxu0 0
          %695 = vmatpush1.bf16.xpose.msra.mxu0 0
          %696 = vmatprep.subr.bf16.mxu0 0
          %697 = vmatpush1.bf16.xpose.msra.mxu0 0
          %698 = vmatprep.subr.bf16.mxu0 0
          %699 = vmatpush1.bf16.xpose.msra.mxu0 0
          %700 = vmatprep.subr.bf16.mxu0 0
          %701 = vmatpush1.bf16.xpose.msra.mxu0 0
          %702 = vmatprep.subr.bf16.mxu0 0
          %703 = vmatpush1.bf16.xpose.msra.mxu0 0
          %704 = vmatprep.subr.bf16.mxu0 0
          %705 = vmatpush1.bf16.xpose.msra.mxu0 0
          %706 = vmatprep.subr.bf16.mxu0 0
          %707 = vmatpush1.bf16.xpose.msra.mxu0 0
          %708 = vmatprep.subr.bf16.mxu0 0
          %709 = vmatpush1.bf16.xpose.msra.mxu0 0
          %710 = vmatprep.subr.bf16.mxu0 0
          %711 = vmatpush1.bf16.xpose.msra.mxu0 0
          %712 = vmatprep.subr.bf16.mxu0 0
          %713 = vmatpush1.bf16.xpose.msra.mxu0 0
          %714 = vmatprep.subr.bf16.mxu0 0
          %715 = vmatpush1.bf16.xpose.msra.mxu0 0
          %716 = vmatprep.subr.bf16.mxu0 0
          %717 = vmatpush1.bf16.xpose.msra.mxu0 0
          %718 = vmatprep.mubr.bf16.mxu0 %v679
          %719 = vmatmul.mubr.bf16.gmra.mrb[0].mxu0 %v678
          %v720 = vpop.f32.mrb[0].mxu0
          %v721 = vadd.f32 0.0, %v720
          %v722 = vpop.f32.mrb[0].mxu0
          %v723 = vpop.f32.mrb[0].mxu0
          %v724 = vpop.f32.mrb[0].mxu0
          %725 = vdwg.mxu0
          %726 = vmatprep.subr.bf16.mxu0 %v501
          %727 = vmatpush1.bf16.xpose.msra.mxu0 %v500
          %728 = vmatprep.subr.bf16.mxu0 0
          %729 = vmatpush1.bf16.xpose.msra.mxu0 0
          %730 = vmatprep.subr.bf16.mxu0 0
          %731 = vmatpush1.bf16.xpose.msra.mxu0 0
          %732 = vmatprep.subr.bf16.mxu0 0
          %733 = vmatpush1.bf16.xpose.msra.mxu0 0
          %734 = vmatprep.subr.bf16.mxu0 0
          %735 = vmatpush1.bf16.xpose.msra.mxu0 0
          %736 = vmatprep.subr.bf16.mxu0 0
          %737 = vmatpush1.bf16.xpose.msra.mxu0 0
          %738 = vmatprep.subr.bf16.mxu0 0
          %739 = vmatpush1.bf16.xpose.msra.mxu0 0
          %740 = vmatprep.subr.bf16.mxu0 0
          %741 = vmatpush1.bf16.xpose.msra.mxu0 0
          %742 = vmatprep.subr.bf16.mxu0 0
          %743 = vmatpush1.bf16.xpose.msra.mxu0 0
          %744 = vmatprep.subr.bf16.mxu0 0
          %745 = vmatpush1.bf16.xpose.msra.mxu0 0
          %746 = vmatprep.subr.bf16.mxu0 0
          %747 = vmatpush1.bf16.xpose.msra.mxu0 0
          %748 = vmatprep.subr.bf16.mxu0 0
          %749 = vmatpush1.bf16.xpose.msra.mxu0 0
          %750 = vmatprep.subr.bf16.mxu0 0
          %751 = vmatpush1.bf16.xpose.msra.mxu0 0
          %752 = vmatprep.subr.bf16.mxu0 0
          %753 = vmatpush1.bf16.xpose.msra.mxu0 0
          %754 = vmatprep.subr.bf16.mxu0 0
          %755 = vmatpush1.bf16.xpose.msra.mxu0 0
          %756 = vmatprep.subr.bf16.mxu0 0
          %757 = vmatpush1.bf16.xpose.msra.mxu0 0
          %758 = vmatprep.mubr.bf16.mxu0 %v681
          %759 = vmatmul.mubr.bf16.gmra.mrb[0].mxu0 %v680
          %v760 = vpop.f32.mrb[0].mxu0
          %v761 = vadd.f32 %v721, %v760
          %v762 = vpop.f32.mrb[0].mxu0
          %v763 = vpop.f32.mrb[0].mxu0
          %v764 = vpop.f32.mrb[0].mxu0
          %765 = vdwg.mxu0
          %766 = vmatprep.subr.bf16.mxu0 %v503
          %767 = vmatpush1.bf16.xpose.msra.mxu0 %v502
          %768 = vmatprep.subr.bf16.mxu0 0
          %769 = vmatpush1.bf16.xpose.msra.mxu0 0
          %770 = vmatprep.subr.bf16.mxu0 0
          %771 = vmatpush1.bf16.xpose.msra.mxu0 0
          %772 = vmatprep.subr.bf16.mxu0 0
          %773 = vmatpush1.bf16.xpose.msra.mxu0 0
          %774 = vmatprep.subr.bf16.mxu0 0
          %775 = vmatpush1.bf16.xpose.msra.mxu0 0
          %776 = vmatprep.subr.bf16.mxu0 0
          %777 = vmatpush1.bf16.xpose.msra.mxu0 0
          %778 = vmatprep.subr.bf16.mxu0 0
          %779 = vmatpush1.bf16.xpose.msra.mxu0 0
          %780 = vmatprep.subr.bf16.mxu0 0
          %781 = vmatpush1.bf16.xpose.msra.mxu0 0
          %782 = vmatprep.subr.bf16.mxu0 0
          %783 = vmatpush1.bf16.xpose.msra.mxu0 0
          %784 = vmatprep.subr.bf16.mxu0 0
          %785 = vmatpush1.bf16.xpose.msra.mxu0 0
          %786 = vmatprep.subr.bf16.mxu0 0
          %787 = vmatpush1.bf16.xpose.msra.mxu0 0
          %788 = vmatprep.subr.bf16.mxu0 0
          %789 = vmatpush1.bf16.xpose.msra.mxu0 0
          %790 = vmatprep.subr.bf16.mxu0 0
          %791 = vmatpush1.bf16.xpose.msra.mxu0 0
          %792 = vmatprep.subr.bf16.mxu0 0
          %793 = vmatpush1.bf16.xpose.msra.mxu0 0
          %794 = vmatprep.subr.bf16.mxu0 0
          %795 = vmatpush1.bf16.xpose.msra.mxu0 0
          %796 = vmatprep.subr.bf16.mxu0 0
          %797 = vmatpush1.bf16.xpose.msra.mxu0 0
          %798 = vmatprep.mubr.bf16.mxu0 %v683
          %799 = vmatmul.mubr.bf16.gmra.mrb[0].mxu0 %v682
          %v800 = vpop.f32.mrb[0].mxu0
          %v801 = vadd.f32 %v761, %v800
          %v802 = vpop.f32.mrb[0].mxu0
          %v803 = vpop.f32.mrb[0].mxu0
          %v804 = vpop.f32.mrb[0].mxu0
          %805 = vdwg.mxu0
          %806 = vmatprep.subr.bf16.mxu0 %v505
          %807 = vmatpush1.bf16.xpose.msra.mxu0 %v504
          %808 = vmatprep.subr.bf16.mxu0 0
          %809 = vmatpush1.bf16.xpose.msra.mxu0 0
          %810 = vmatprep.subr.bf16.mxu0 0
          %811 = vmatpush1.bf16.xpose.msra.mxu0 0
          %812 = vmatprep.subr.bf16.mxu0 0
          %813 = vmatpush1.bf16.xpose.msra.mxu0 0
          %814 = vmatprep.subr.bf16.mxu0 0
          %815 = vmatpush1.bf16.xpose.msra.mxu0 0
          %816 = vmatprep.subr.bf16.mxu0 0
          %817 = vmatpush1.bf16.xpose.msra.mxu0 0
          %818 = vmatprep.subr.bf16.mxu0 0
          %819 = vmatpush1.bf16.xpose.msra.mxu0 0
          %820 = vmatprep.subr.bf16.mxu0 0
          %821 = vmatpush1.bf16.xpose.msra.mxu0 0
          %822 = vmatprep.subr.bf16.mxu0 0
          %823 = vmatpush1.bf16.xpose.msra.mxu0 0
          %824 = vmatprep.subr.bf16.mxu0 0
          %825 = vmatpush1.bf16.xpose.msra.mxu0 0
          %826 = vmatprep.subr.bf16.mxu0 0
          %827 = vmatpush1.bf16.xpose.msra.mxu0 0
          %828 = vmatprep.subr.bf16.mxu0 0
          %829 = vmatpush1.bf16.xpose.msra.mxu0 0
          %830 = vmatprep.subr.bf16.mxu0 0
          %831 = vmatpush1.bf16.xpose.msra.mxu0 0
          %832 = vmatprep.subr.bf16.mxu0 0
          %833 = vmatpush1.bf16.xpose.msra.mxu0 0
          %834 = vmatprep.subr.bf16.mxu0 0
          %835 = vmatpush1.bf16.xpose.msra.mxu0 0
          %836 = vmatprep.subr.bf16.mxu0 0
          %837 = vmatpush1.bf16.xpose.msra.mxu0 0
          %838 = vmatprep.mubr.bf16.mxu0 %v685
          %839 = vmatmul.mubr.bf16.gmra.mrb[0].mxu0 %v684
          %v840 = vpop.f32.mrb[0].mxu0
          %v841 = vadd.f32 %v801, %v840
          %v842 = vpop.f32.mrb[0].mxu0
          %v843 = vpop.f32.mrb[0].mxu0
          %v844 = vpop.f32.mrb[0].mxu0
          %845 = vdwg.mxu0
          %v846 = vadd.f32 %v677, %v841
          %vm847 = vcmask 122880
          %848 = vst.msk [vmem:[#allocation3] sm:$0x1] %vm847, %v846
        $region36: #{contrastive_intra_view_lucas_loss.1} parent=31 // pred_fallthru
          _
        %p849 = scmp.eq.s32.totalorder %s23, 1
        %p850 = pnand %p849, %p278
        %p851 = pneg %p850
        // Predicated region
        $region41: #{contrastive_intra_view_lucas_loss.1} parent=31 // pred_check
          _
        $region42: #{contrastive_intra_view_lucas_loss.1} parent=31 // pred_check_branch
          %853 = sbr.rel (%p850) target = $region44
        $region43: #{contrastive_intra_view_lucas_loss.1} parent=31 // pred_region
          %v854 = vld [vmem:[#allocation3] sm:$0x1]
          %vm855 = vcmp.gt.f32.partialorder %v854, 0.0
          %v856 = vsel %vm855, 1, 0
          %v857 = vcvt.s32.f32 %v856
          %v858 = vlaneseq
          %v859 = vand.u32 %v858, 127
          %vm860 = vcmp.lt.s32.totalorder %v271, %v859
          %vm861 = vcmp.lt.s32.totalorder %v272, %v859
          %v862 = vsel %vm860, 1, 0
          %v863 = vsel %vm861, 1, 0
          %v864 = vcvt.s32.f32 %v862
          %v865 = vcvt.s32.f32 %v863
          %vm866 = vcmask 130048
          %v868 = vsel %vm866, %v857, 0
          %870 = vmatprep.subr.mxu0 0.0
          %871 = vmatpush1.msra.mxu0 %v864
          %872 = vmatprep.subr.mxu0 0.0
          %873 = vmatpush1.msra.mxu0 %v865
          %874 = vmatprep.subr.mxu0 0.0
          %875 = vmatpush1.msra.mxu0 0.0
          %876 = vmatprep.subr.mxu0 0.0
          %877 = vmatpush1.msra.mxu0 0.0
          %878 = vmatprep.subr.mxu0 0.0
          %879 = vmatpush1.msra.mxu0 0.0
          %880 = vmatprep.subr.mxu0 0.0
          %881 = vmatpush1.msra.mxu0 0.0
          %882 = vmatprep.subr.mxu0 0.0
          %883 = vmatpush1.msra.mxu0 0.0
          %884 = vmatprep.subr.mxu0 0.0
          %885 = vmatpush1.msra.mxu0 0.0
          %886 = vmatprep.subr.mxu0 0.0
          %887 = vmatpush1.msra.mxu0 0.0
          %888 = vmatprep.subr.mxu0 0.0
          %889 = vmatpush1.msra.mxu0 0.0
          %890 = vmatprep.subr.mxu0 0.0
          %891 = vmatpush1.msra.mxu0 0.0
          %892 = vmatprep.subr.mxu0 0.0
          %893 = vmatpush1.msra.mxu0 0.0
          %894 = vmatprep.subr.mxu0 0.0
          %895 = vmatpush1.msra.mxu0 0.0
          %896 = vmatprep.subr.mxu0 0.0
          %897 = vmatpush1.msra.mxu0 0.0
          %898 = vmatprep.subr.mxu0 0.0
          %899 = vmatpush1.msra.mxu0 0.0
          %900 = vmatprep.subr.mxu0 0.0
          %901 = vmatpush1.msra.mxu0 0.0
          %902 = vmatprep.subr.mxu0 0.0
          %903 = vmatpush1.msra.mxu0 0.0
          %904 = vmatprep.subr.mxu0 0.0
          %905 = vmatpush1.msra.mxu0 0.0
          %906 = vmatprep.subr.mxu0 0.0
          %907 = vmatpush1.msra.mxu0 0.0
          %908 = vmatprep.subr.mxu0 0.0
          %909 = vmatpush1.msra.mxu0 0.0
          %910 = vmatprep.subr.mxu0 0.0
          %911 = vmatpush1.msra.mxu0 0.0
          %912 = vmatprep.subr.mxu0 0.0
          %913 = vmatpush1.msra.mxu0 0.0
          %914 = vmatprep.subr.mxu0 0.0
          %915 = vmatpush1.msra.mxu0 0.0
          %916 = vmatprep.subr.mxu0 0.0
          %917 = vmatpush1.msra.mxu0 0.0
          %918 = vmatprep.subr.mxu0 0.0
          %919 = vmatpush1.msra.mxu0 0.0
          %920 = vmatprep.subr.mxu0 0.0
          %921 = vmatpush1.msra.mxu0 0.0
          %922 = vmatprep.subr.mxu0 0.0
          %923 = vmatpush1.msra.mxu0 0.0
          %924 = vmatprep.subr.mxu0 0.0
          %925 = vmatpush1.msra.mxu0 0.0
          %926 = vmatprep.subr.mxu0 0.0
          %927 = vmatpush1.msra.mxu0 0.0
          %928 = vmatprep.subr.mxu0 0.0
          %929 = vmatpush1.msra.mxu0 0.0
          %930 = vmatprep.subr.mxu0 0.0
          %931 = vmatpush1.msra.mxu0 0.0
          %932 = vmatprep.subr.mxu0 0.0
          %933 = vmatpush1.msra.mxu0 0.0
          %934 = vmatprep.mubr.f32.mxu0 0.0
          %935 = vmatmul.mubr.f32.gmra.mrb[0].mxu0 %v868
          %v936 = vpop.f32.mrb[0].mxu0
          %v937 = vadd.f32 0.0, %v936
          %v938 = vpop.f32.mrb[0].mxu0
          %939 = vdwg.mxu0
          %v940 = vcvt.s32.f32 %v271
          %v941 = vcvt.s32.f32 %v272
          %v942 = vlaneseq
          %v943 = vshrl.u32 %v942, 7
          %v944 = vsub.s32 0, %v943
          %v945 = vrot.slane %v937, %v944
          %vm946 = vcmp.eq.f32.partialorder %v945, %v940
          %vm947 = vcmp.eq.f32.partialorder %v945, %v941
          %vm948 = vcmp.gt.f32.partialorder %v857, 0.5
          %v949 = vsel %vm948, 1, 0
          %v950 = vlaneseq
          %v951 = vshrl.u32 %v950, 7
          %v952 = vsub.s32 0, %v951
          %v953 = vrot.slane %v949, %v952
          %vm954 = vcmp.eq.s32.totalorder %v953, 1
          %vm955 = vmand %vm946, %vm954
          %vm956 = vmand %vm947, %vm954
          %v957 = vmax.f32 %v854, 1.0
          %v958 = vrcp.pop %v957
          %v959 = vmul.f32 1.0, %v958
          %v961 = vlaneseq
          %v962 = vshrl.u32 %v961, 7
          %v963 = vsub.s32 0, %v962
          %v964 = vrot.slane %v959, %v963
          %v966 = vsel %vm955, %v964, 0.0
          %v967 = vsel %vm956, %v964, 0.0
          %v968 = vld [vmem:[#allocation2] sm:$0xff]
          %v969 = vld [vmem:[#allocation2 + $0x8] sm:$0xff]
          %v971 = vsel %vm866, %v966, 0
          %v974 = vsel %vm866, %v967, 0
          %976 = vmatprep.subr.mxu0 0.0
          %977 = vmatpush1.msra.mxu0 %v968
          %978 = vmatprep.subr.mxu0 0.0
          %979 = vmatpush1.msra.mxu0 %v969
          %980 = vmatprep.subr.mxu0 0.0
          %981 = vmatpush1.msra.mxu0 0.0
          %982 = vmatprep.subr.mxu0 0.0
          %983 = vmatpush1.msra.mxu0 0.0
          %984 = vmatprep.subr.mxu0 0.0
          %985 = vmatpush1.msra.mxu0 0.0
          %986 = vmatprep.subr.mxu0 0.0
          %987 = vmatpush1.msra.mxu0 0.0
          %988 = vmatprep.subr.mxu0 0.0
          %989 = vmatpush1.msra.mxu0 0.0
          %990 = vmatprep.subr.mxu0 0.0
          %991 = vmatpush1.msra.mxu0 0.0
          %992 = vmatprep.subr.mxu0 0.0
          %993 = vmatpush1.msra.mxu0 0.0
          %994 = vmatprep.subr.mxu0 0.0
          %995 = vmatpush1.msra.mxu0 0.0
          %996 = vmatprep.subr.mxu0 0.0
          %997 = vmatpush1.msra.mxu0 0.0
          %998 = vmatprep.subr.mxu0 0.0
          %999 = vmatpush1.msra.mxu0 0.0
          %1000 = vmatprep.subr.mxu0 0.0
          %1001 = vmatpush1.msra.mxu0 0.0
          %1002 = vmatprep.subr.mxu0 0.0
          %1003 = vmatpush1.msra.mxu0 0.0
          %1004 = vmatprep.subr.mxu0 0.0
          %1005 = vmatpush1.msra.mxu0 0.0
          %1006 = vmatprep.subr.mxu0 0.0
          %1007 = vmatpush1.msra.mxu0 0.0
          %1008 = vmatprep.subr.mxu0 0.0
          %1009 = vmatpush1.msra.mxu0 0.0
          %1010 = vmatprep.subr.mxu0 0.0
          %1011 = vmatpush1.msra.mxu0 0.0
          %1012 = vmatprep.subr.mxu0 0.0
          %1013 = vmatpush1.msra.mxu0 0.0
          %1014 = vmatprep.subr.mxu0 0.0
          %1015 = vmatpush1.msra.mxu0 0.0
          %1016 = vmatprep.subr.mxu0 0.0
          %1017 = vmatpush1.msra.mxu0 0.0
          %1018 = vmatprep.subr.mxu0 0.0
          %1019 = vmatpush1.msra.mxu0 0.0
          %1020 = vmatprep.subr.mxu0 0.0
          %1021 = vmatpush1.msra.mxu0 0.0
          %1022 = vmatprep.subr.mxu0 0.0
          %1023 = vmatpush1.msra.mxu0 0.0
          %1024 = vmatprep.subr.mxu0 0.0
          %1025 = vmatpush1.msra.mxu0 0.0
          %1026 = vmatprep.subr.mxu0 0.0
          %1027 = vmatpush1.msra.mxu0 0.0
          %1028 = vmatprep.subr.mxu0 0.0
          %1029 = vmatpush1.msra.mxu0 0.0
          %1030 = vmatprep.subr.mxu0 0.0
          %1031 = vmatpush1.msra.mxu0 0.0
          %1032 = vmatprep.subr.mxu0 0.0
          %1033 = vmatpush1.msra.mxu0 0.0
          %1034 = vmatprep.subr.mxu0 0.0
          %1035 = vmatpush1.msra.mxu0 0.0
          %1036 = vmatprep.subr.mxu0 0.0
          %1037 = vmatpush1.msra.mxu0 0.0
          %1038 = vmatprep.subr.mxu0 0.0
          %1039 = vmatpush1.msra.mxu0 0.0
          %1040 = vmatprep.mubr.f32.mxu0 0.0
          %1041 = vmatmul.mubr.f32.gmra.mrb[0].mxu0 %v971
          %v1042 = vpop.f32.mrb[0].mxu0
          %v1043 = vadd.f32 0.0, %v1042
          %v1044 = vpop.f32.mrb[0].mxu0
          %1045 = vmatprep.mubr.f32.mxu0 0.0
          %1046 = vmatmul.mubr.f32.gmra.mrb[0].mxu0 %v974
          %v1047 = vpop.f32.mrb[0].mxu0
          %v1048 = vadd.f32 0.0, %v1047
          %v1049 = vpop.f32.mrb[0].mxu0
          %1050 = vdwg.mxu0
          %vm1051 = vcmask 122880
          %v1052 = vsel %vm1051, %v857, 0.0
          %1053 = vadd.xlane.f32.xlu0 %v1052
          %v1054 = vpop.xlane.xlu0 %1053
          %v1055 = vcvt.f32.s32.to.zero.pseudo %v1054
          %v1056 = vlaneseq
          %v1057 = vshrl.u32 %v1056, 7
          %v1058 = vsub.s32 0, %v1057
          %v1059 = vrot.slane %v1055, %v1058
          %vm1060 = vcmp.lt.s32.totalorder %v271, %v1059
          %vm1061 = vcmp.lt.s32.totalorder %v272, %v1059
          %v1062 = vmul.f32 %v1043, 0.99
          %v1063 = vmul.f32 %v1048, 0.99
          %v1064 = vld [vmem:[%s0] sm:$0xff]
          %v1065 = vld [vmem:[%s0 + $0x8] sm:$0xff]
          %v1066 = vmul.f32 %v1064, 0.01
          %v1067 = vmul.f32 %v1065, 0.01
          %v1068 = vadd.f32 %v1062, %v1066
          %v1069 = vadd.f32 %v1063, %v1067
          %v1070 = vsel %vm1060, 1, 0
          %v1071 = vsel %vm1061, 1, 0
          %vm1072 = vcmp.eq.s32.totalorder %v1070, 1
          %vm1073 = vcmp.eq.s32.totalorder %v1071, 1
          %v1074 = vsel %vm1072, %v1068, %v1064
          %v1075 = vsel %vm1073, %v1069, %v1065
          %v1076 = vmul.f32 %v1074, %v1074
          %v1077 = vmul.f32 %v1075, %v1075
          %vm1078 = vcmask 261120
          %v1079 = vsel %vm1078, %v1076, 0.0
          %1080 = vadd.xlane.f32.xlu0 %v1079
          %v1081 = vpop.xlane.xlu0 %1080
          %v1082 = vsel %vm1078, %v1077, 0.0
          %1083 = vadd.xlane.f32.xlu0 %v1082
          %v1084 = vpop.xlane.xlu0 %1083
          %v1085 = vrsqrt.pop %v1081
          %v1086 = vmul.f32 %v1081, %v1085
          %vm1087 = vcmp.eq.f32.partialorder %v1081, inf
          %v1088 = vsel %vm1087, %v1081, %v1086
          %vm1089 = vcmp.eq.f32.partialorder %v1081, 0.0
          %v1090 = vand.u32 %v1081, 2147483648
          %v1091 = vsel %vm1089, %v1090, %v1088
          %v1092 = vrsqrt.pop %v1084
          %v1093 = vmul.f32 %v1084, %v1092
          %vm1094 = vcmp.eq.f32.partialorder %v1084, inf
          %v1095 = vsel %vm1094, %v1084, %v1093
          %vm1096 = vcmp.eq.f32.partialorder %v1084, 0.0
          %v1097 = vand.u32 %v1084, 2147483648
          %v1098 = vsel %vm1096, %v1097, %v1095
          %v1099 = vmax.f32 %v1091, 1e-12
          %v1100 = vmax.f32 %v1098, 1e-12
          %v1101 = vrcp.pop %v1099
          %v1102 = vmul.f32 %v1074, %v1101
          %v1103 = vrcp.pop %v1100
          %v1104 = vmul.f32 %v1075, %v1103
          %1105 = vst.msk [vmem:[#allocation4] sm:$0xff] %vm1078, %v1102
          %1106 = vst.msk [vmem:[#allocation4 + $0x8] sm:$0xff] %vm1078, %v1104
          %vm1107 = vcmask 7168
          %1108 = vst.msk [vmem:[#allocation5] sm:$0xff] %vm1107, 0.0
          %1109 = vst.msk [vmem:[#allocation5 + $0x8] sm:$0xff] %vm1107, 0.0
        $region44: #{contrastive_intra_view_lucas_loss.1} parent=31 // pred_fallthru
          _
        // Predicated region
        $region45: #{contrastive_intra_view_lucas_loss.1} parent=31 // pred_check
          %p1110 = pneg %p849
        $region46: #{contrastive_intra_view_lucas_loss.1} parent=31 // pred_check_branch
          %1112 = sbr.rel (%p1110) target = $region48
        $region47: #{contrastive_intra_view_lucas_loss.1} parent=31 // pred_region
          %s1113 = sadd.s32 %s24, %s25
          %s1114 = smul.u32 %s1113, 16
          %s1115 = smul.addr %s1114, 8
          %s1116 = scalar_lea.vmem [#allocation8], %s1115
          %v1117 = vld [vmem:[%s1116] sm:$0xff]
          %v1118 = vld [vmem:[%s1116 + $0x8] sm:$0xff]
          %v1119 = vld [vmem:[%s1116 + $0x10] sm:$0xff]
          %v1120 = vld [vmem:[%s1116 + $0x18] sm:$0xff]
          %v1121 = vld [vmem:[%s1116 + $0x20] sm:$0xff]
          %v1122 = vld [vmem:[%s1116 + $0x28] sm:$0xff]
          %v1123 = vld [vmem:[%s1116 + $0x30] sm:$0xff]
          %v1124 = vld [vmem:[%s1116 + $0x38] sm:$0xff]
          %v1125 = vld [vmem:[%s1116 + $0x40] sm:$0xff]
          %v1126 = vld [vmem:[%s1116 + $0x48] sm:$0xff]
          %v1127 = vld [vmem:[%s1116 + $0x50] sm:$0xff]
          %v1128 = vld [vmem:[%s1116 + $0x58] sm:$0xff]
          %v1129 = vld [vmem:[%s1116 + $0x60] sm:$0xff]
          %v1130 = vld [vmem:[%s1116 + $0x68] sm:$0xff]
          %v1131 = vld [vmem:[%s1116 + $0x70] sm:$0xff]
          %v1132 = vld [vmem:[%s1116 + $0x78] sm:$0xff]
          %v1133 = vld [vmem:[#allocation4] sm:$0xff]
          %v1134 = vld [vmem:[#allocation4 + $0x8] sm:$0xff]
          %v1135 = vpack.c.bf16 %v1134, %v1133
          %vm1136 = vcmask 261120
          %v1138 = vsel %vm1136, %v1135, 0
          %1140 = vmatprep.subr.bf16.mxu0 %v1118
          %1141 = vmatpush1.bf16.msra.mxu0 %v1117
          %1142 = vmatprep.subr.bf16.mxu0 %v1126
          %1143 = vmatpush1.bf16.msra.mxu0 %v1125
          %1144 = vmatprep.subr.bf16.mxu0 0
          %1145 = vmatpush1.bf16.msra.mxu0 0
          %1146 = vmatprep.subr.bf16.mxu0 0
          %1147 = vmatpush1.bf16.msra.mxu0 0
          %1148 = vmatprep.subr.bf16.mxu0 0
          %1149 = vmatpush1.bf16.msra.mxu0 0
          %1150 = vmatprep.subr.bf16.mxu0 0
          %1151 = vmatpush1.bf16.msra.mxu0 0
          %1152 = vmatprep.subr.bf16.mxu0 0
          %1153 = vmatpush1.bf16.msra.mxu0 0
          %1154 = vmatprep.subr.bf16.mxu0 0
          %1155 = vmatpush1.bf16.msra.mxu0 0
          %1156 = vmatprep.subr.bf16.mxu0 0
          %1157 = vmatpush1.bf16.msra.mxu0 0
          %1158 = vmatprep.subr.bf16.mxu0 0
          %1159 = vmatpush1.bf16.msra.mxu0 0
          %1160 = vmatprep.subr.bf16.mxu0 0
          %1161 = vmatpush1.bf16.msra.mxu0 0
          %1162 = vmatprep.subr.bf16.mxu0 0
          %1163 = vmatpush1.bf16.msra.mxu0 0
          %1164 = vmatprep.subr.bf16.mxu0 0
          %1165 = vmatpush1.bf16.msra.mxu0 0
          %1166 = vmatprep.subr.bf16.mxu0 0
          %1167 = vmatpush1.bf16.msra.mxu0 0
          %1168 = vmatprep.subr.bf16.mxu0 0
          %1169 = vmatpush1.bf16.msra.mxu0 0
          %1170 = vmatprep.subr.bf16.mxu0 0
          %1171 = vmatpush1.bf16.msra.mxu0 0
          %1172 = vmatprep.mubr.bf16.mxu0 0
          %1173 = vmatmul.mubr.bf16.gmra.mrb[0].mxu0 %v1138
          %v1174 = vpop.f32.mrb[0].mxu0
          %v1175 = vadd.f32 0.0, %v1174
          %v1176 = vpop.f32.mrb[0].mxu0
          %v1177 = vadd.f32 0.0, %v1176
          %v1178 = vpop.f32.mrb[0].mxu0
          %v1179 = vadd.f32 0.0, %v1178
          %v1180 = vpop.f32.mrb[0].mxu0
          %v1181 = vadd.f32 0.0, %v1180
          %1182 = vdwg.mxu0
          %1183 = vmatprep.subr.bf16.mxu0 %v1120
          %1184 = vmatpush1.bf16.msra.mxu0 %v1119
          %1185 = vmatprep.subr.bf16.mxu0 %v1128
          %1186 = vmatpush1.bf16.msra.mxu0 %v1127
          %1187 = vmatprep.subr.bf16.mxu0 0
          %1188 = vmatpush1.bf16.msra.mxu0 0
          %1189 = vmatprep.subr.bf16.mxu0 0
          %1190 = vmatpush1.bf16.msra.mxu0 0
          %1191 = vmatprep.subr.bf16.mxu0 0
          %1192 = vmatpush1.bf16.msra.mxu0 0
          %1193 = vmatprep.subr.bf16.mxu0 0
          %1194 = vmatpush1.bf16.msra.mxu0 0
          %1195 = vmatprep.subr.bf16.mxu0 0
          %1196 = vmatpush1.bf16.msra.mxu0 0
          %1197 = vmatprep.subr.bf16.mxu0 0
          %1198 = vmatpush1.bf16.msra.mxu0 0
          %1199 = vmatprep.subr.bf16.mxu0 0
          %1200 = vmatpush1.bf16.msra.mxu0 0
          %1201 = vmatprep.subr.bf16.mxu0 0
          %1202 = vmatpush1.bf16.msra.mxu0 0
          %1203 = vmatprep.subr.bf16.mxu0 0
          %1204 = vmatpush1.bf16.msra.mxu0 0
          %1205 = vmatprep.subr.bf16.mxu0 0
          %1206 = vmatpush1.bf16.msra.mxu0 0
          %1207 = vmatprep.subr.bf16.mxu0 0
          %1208 = vmatpush1.bf16.msra.mxu0 0
          %1209 = vmatprep.subr.bf16.mxu0 0
          %1210 = vmatpush1.bf16.msra.mxu0 0
          %1211 = vmatprep.subr.bf16.mxu0 0
          %1212 = vmatpush1.bf16.msra.mxu0 0
          %1213 = vmatprep.subr.bf16.mxu0 0
          %1214 = vmatpush1.bf16.msra.mxu0 0
          %1215 = vmatprep.mubr.bf16.mxu0 0
          %1216 = vmatmul.mubr.bf16.gmra.mrb[0].mxu0 %v1138
          %v1217 = vpop.f32.mrb[0].mxu0
          %v1218 = vadd.f32 0.0, %v1217
          %v1219 = vpop.f32.mrb[0].mxu0
          %v1220 = vadd.f32 0.0, %v1219
          %v1221 = vpop.f32.mrb[0].mxu0
          %v1222 = vadd.f32 0.0, %v1221
          %v1223 = vpop.f32.mrb[0].mxu0
          %v1224 = vadd.f32 0.0, %v1223
          %1225 = vdwg.mxu0
          %1226 = vmatprep.subr.bf16.mxu0 %v1122
          %1227 = vmatpush1.bf16.msra.mxu0 %v1121
          %1228 = vmatprep.subr.bf16.mxu0 %v1130
          %1229 = vmatpush1.bf16.msra.mxu0 %v1129
          %1230 = vmatprep.subr.bf16.mxu0 0
          %1231 = vmatpush1.bf16.msra.mxu0 0
          %1232 = vmatprep.subr.bf16.mxu0 0
          %1233 = vmatpush1.bf16.msra.mxu0 0
          %1234 = vmatprep.subr.bf16.mxu0 0
          %1235 = vmatpush1.bf16.msra.mxu0 0
          %1236 = vmatprep.subr.bf16.mxu0 0
          %1237 = vmatpush1.bf16.msra.mxu0 0
          %1238 = vmatprep.subr.bf16.mxu0 0
          %1239 = vmatpush1.bf16.msra.mxu0 0
          %1240 = vmatprep.subr.bf16.mxu0 0
          %1241 = vmatpush1.bf16.msra.mxu0 0
          %1242 = vmatprep.subr.bf16.mxu0 0
          %1243 = vmatpush1.bf16.msra.mxu0 0
          %1244 = vmatprep.subr.bf16.mxu0 0
          %1245 = vmatpush1.bf16.msra.mxu0 0
          %1246 = vmatprep.subr.bf16.mxu0 0
          %1247 = vmatpush1.bf16.msra.mxu0 0
          %1248 = vmatprep.subr.bf16.mxu0 0
          %1249 = vmatpush1.bf16.msra.mxu0 0
          %1250 = vmatprep.subr.bf16.mxu0 0
          %1251 = vmatpush1.bf16.msra.mxu0 0
          %1252 = vmatprep.subr.bf16.mxu0 0
          %1253 = vmatpush1.bf16.msra.mxu0 0
          %1254 = vmatprep.subr.bf16.mxu0 0
          %1255 = vmatpush1.bf16.msra.mxu0 0
          %1256 = vmatprep.subr.bf16.mxu0 0
          %1257 = vmatpush1.bf16.msra.mxu0 0
          %1258 = vmatprep.mubr.bf16.mxu0 0
          %1259 = vmatmul.mubr.bf16.gmra.mrb[0].mxu0 %v1138
          %v1260 = vpop.f32.mrb[0].mxu0
          %v1261 = vadd.f32 0.0, %v1260
          %v1262 = vpop.f32.mrb[0].mxu0
          %v1263 = vadd.f32 0.0, %v1262
          %v1264 = vpop.f32.mrb[0].mxu0
          %v1265 = vadd.f32 0.0, %v1264
          %v1266 = vpop.f32.mrb[0].mxu0
          %v1267 = vadd.f32 0.0, %v1266
          %1268 = vdwg.mxu0
          %1269 = vmatprep.subr.bf16.mxu0 %v1124
          %1270 = vmatpush1.bf16.msra.mxu0 %v1123
          %1271 = vmatprep.subr.bf16.mxu0 %v1132
          %1272 = vmatpush1.bf16.msra.mxu0 %v1131
          %1273 = vmatprep.subr.bf16.mxu0 0
          %1274 = vmatpush1.bf16.msra.mxu0 0
          %1275 = vmatprep.subr.bf16.mxu0 0
          %1276 = vmatpush1.bf16.msra.mxu0 0
          %1277 = vmatprep.subr.bf16.mxu0 0
          %1278 = vmatpush1.bf16.msra.mxu0 0
          %1279 = vmatprep.subr.bf16.mxu0 0
          %1280 = vmatpush1.bf16.msra.mxu0 0
          %1281 = vmatprep.subr.bf16.mxu0 0
          %1282 = vmatpush1.bf16.msra.mxu0 0
          %1283 = vmatprep.subr.bf16.mxu0 0
          %1284 = vmatpush1.bf16.msra.mxu0 0
          %1285 = vmatprep.subr.bf16.mxu0 0
          %1286 = vmatpush1.bf16.msra.mxu0 0
          %1287 = vmatprep.subr.bf16.mxu0 0
          %1288 = vmatpush1.bf16.msra.mxu0 0
          %1289 = vmatprep.subr.bf16.mxu0 0
          %1290 = vmatpush1.bf16.msra.mxu0 0
          %1291 = vmatprep.subr.bf16.mxu0 0
          %1292 = vmatpush1.bf16.msra.mxu0 0
          %1293 = vmatprep.subr.bf16.mxu0 0
          %1294 = vmatpush1.bf16.msra.mxu0 0
          %1295 = vmatprep.subr.bf16.mxu0 0
          %1296 = vmatpush1.bf16.msra.mxu0 0
          %1297 = vmatprep.subr.bf16.mxu0 0
          %1298 = vmatpush1.bf16.msra.mxu0 0
          %1299 = vmatprep.subr.bf16.mxu0 0
          %1300 = vmatpush1.bf16.msra.mxu0 0
          %1301 = vmatprep.mubr.bf16.mxu0 0
          %1302 = vmatmul.mubr.bf16.gmra.mrb[0].mxu0 %v1138
          %v1303 = vpop.f32.mrb[0].mxu0
          %v1304 = vadd.f32 0.0, %v1303
          %v1305 = vpop.f32.mrb[0].mxu0
          %v1306 = vadd.f32 0.0, %v1305
          %v1307 = vpop.f32.mrb[0].mxu0
          %v1308 = vadd.f32 0.0, %v1307
          %v1309 = vpop.f32.mrb[0].mxu0
          %v1310 = vadd.f32 0.0, %v1309
          %1311 = vdwg.mxu0
          %v1313 = vlaneseq
          %v1314 = vshrl.u32 %v1313, 7
          %v1315 = vsub.s32 0, %v1314
          %v1316 = vrot.slane %v269, %v1315
          %v1317 = vlaneseq
          %v1318 = vshrl.u32 %v1317, 7
          %v1319 = vsub.s32 1, %v1318
          %v1320 = vrot.slane %v269, %v1319
          %v1321 = vlaneseq
          %v1322 = vshrl.u32 %v1321, 7
          %v1323 = vsub.s32 2, %v1322
          %v1324 = vrot.slane %v269, %v1323
          %v1325 = vlaneseq
          %v1326 = vshrl.u32 %v1325, 7
          %v1327 = vsub.s32 3, %v1326
          %v1328 = vrot.slane %v269, %v1327
          %v1329 = vlaneseq
          %v1330 = vshrl.u32 %v1329, 7
          %v1331 = vsub.s32 4, %v1330
          %v1332 = vrot.slane %v269, %v1331
          %v1333 = vlaneseq
          %v1334 = vshrl.u32 %v1333, 7
          %v1335 = vsub.s32 5, %v1334
          %v1336 = vrot.slane %v269, %v1335
          %v1337 = vlaneseq
          %v1338 = vshrl.u32 %v1337, 7
          %v1339 = vsub.s32 6, %v1338
          %v1340 = vrot.slane %v269, %v1339
          %v1341 = vlaneseq
          %v1342 = vshrl.u32 %v1341, 7
          %v1343 = vsub.s32 7, %v1342
          %v1344 = vrot.slane %v269, %v1343
          %v1353 = vmul.f32 %v1175, %v1316
          %v1354 = vmul.f32 %v1177, %v1320
          %v1355 = vmul.f32 %v1218, %v1324
          %v1356 = vmul.f32 %v1220, %v1328
          %v1357 = vmul.f32 %v1261, %v1332
          %v1358 = vmul.f32 %v1263, %v1336
          %v1359 = vmul.f32 %v1304, %v1340
          %v1360 = vmul.f32 %v1306, %v1344
          %v1361 = vmul.f32 %v1179, %v1316
          %v1362 = vmul.f32 %v1181, %v1320
          %v1363 = vmul.f32 %v1222, %v1324
          %v1364 = vmul.f32 %v1224, %v1328
          %v1365 = vmul.f32 %v1265, %v1332
          %v1366 = vmul.f32 %v1267, %v1336
          %v1367 = vmul.f32 %v1308, %v1340
          %v1368 = vmul.f32 %v1310, %v1344
          %v1369 = vld [vmem:[#allocation5] sm:$0xff]
          %v1370 = vld [vmem:[#allocation5 + $0x8] sm:$0xff]
          %v1371 = vmul.f32 %v1353, %v1353
          %v1372 = vmul.f32 %v1354, %v1354
          %v1373 = vmul.f32 %v1355, %v1355
          %v1374 = vmul.f32 %v1356, %v1356
          %v1375 = vmul.f32 %v1357, %v1357
          %v1376 = vmul.f32 %v1358, %v1358
          %v1377 = vmul.f32 %v1359, %v1359
          %v1378 = vmul.f32 %v1360, %v1360
          %v1379 = vmul.f32 %v1361, %v1361
          %v1380 = vmul.f32 %v1362, %v1362
          %v1381 = vmul.f32 %v1363, %v1363
          %v1382 = vmul.f32 %v1364, %v1364
          %v1383 = vmul.f32 %v1365, %v1365
          %v1384 = vmul.f32 %v1366, %v1366
          %v1385 = vmul.f32 %v1367, %v1367
          %v1386 = vmul.f32 %v1368, %v1368
          %v1387 = vadd.f32 %v1371, %v1372
          %v1388 = vadd.f32 %v1387, %v1373
          %v1389 = vadd.f32 %v1388, %v1374
          %v1390 = vadd.f32 %v1389, %v1375
          %v1391 = vadd.f32 %v1390, %v1376
          %v1392 = vadd.f32 %v1391, %v1377
          %v1393 = vadd.f32 %v1392, %v1378
          %1394 = vadd.xlane.f32.xlu0 %v1393
          %v1395 = vpop.xlane.xlu0 %1394
          %v1396 = vadd.f32 %v1379, %v1380
          %v1397 = vadd.f32 %v1396, %v1381
          %v1398 = vadd.f32 %v1397, %v1382
          %v1399 = vadd.f32 %v1398, %v1383
          %v1400 = vadd.f32 %v1399, %v1384
          %v1401 = vadd.f32 %v1400, %v1385
          %v1402 = vadd.f32 %v1401, %v1386
          %1403 = vadd.xlane.f32.xlu0 %v1402
          %v1404 = vpop.xlane.xlu0 %1403
          %v1405 = vadd.f32 %v1369, %v1395
          %v1406 = vadd.f32 %v1370, %v1404
          %vm1407 = vcmask 7168
          %1408 = vst.msk [vmem:[#allocation5] sm:$0xff] %vm1407, %v1405
          %1409 = vst.msk [vmem:[#allocation5 + $0x8] sm:$0xff] %vm1407, %v1406
        $region48: #{contrastive_intra_view_lucas_loss.1} parent=31 // pred_fallthru
          _
        %p1410 = scmp.eq.s32.totalorder %s23, 2
        %p1411 = pnand %p1410, %p278
        %p1412 = pneg %p1411
        // Predicated region
        $region49: #{contrastive_intra_view_lucas_loss.1} parent=31 // pred_check
          _
        $region50: #{contrastive_intra_view_lucas_loss.1} parent=31 // pred_check_branch
          %1414 = sbr.rel (%p1411) target = $region52
        $region51: #{contrastive_intra_view_lucas_loss.1} parent=31 // pred_region
          %vm1415 = vcmask 0
          %1416 = vst.msk [vmem:[#allocation6] sm:$0x1] %vm1415, 0.0
          %1417 = vst.msk [vmem:[#allocation7] sm:$0x1] %vm1415, 0.0
        $region52: #{contrastive_intra_view_lucas_loss.1} parent=31 // pred_fallthru
          _
        // Predicated region
        $region53: #{contrastive_intra_view_lucas_loss.1} parent=31 // pred_check
          %p1418 = pneg %p1410
        $region54: #{contrastive_intra_view_lucas_loss.1} parent=31 // pred_check_branch
          %1420 = sbr.rel (%p1418) target = $region56
        $region55: #{contrastive_intra_view_lucas_loss.1} parent=31 // pred_region
          %s1421 = sadd.s32 %s24, %s25
          %s1422 = smul.u32 %s1421, 16
          %s1423 = smul.addr %s1422, 8
          %s1424 = scalar_lea.vmem [#allocation8], %s1423
          %v1425 = vld [vmem:[%s1424] sm:$0xff]
          %v1426 = vld [vmem:[%s1424 + $0x8] sm:$0xff]
          %v1427 = vld [vmem:[%s1424 + $0x10] sm:$0xff]
          %v1428 = vld [vmem:[%s1424 + $0x18] sm:$0xff]
          %v1429 = vld [vmem:[%s1424 + $0x20] sm:$0xff]
          %v1430 = vld [vmem:[%s1424 + $0x28] sm:$0xff]
          %v1431 = vld [vmem:[%s1424 + $0x30] sm:$0xff]
          %v1432 = vld [vmem:[%s1424 + $0x38] sm:$0xff]
          %v1433 = vld [vmem:[%s1424 + $0x40] sm:$0xff]
          %v1434 = vld [vmem:[%s1424 + $0x48] sm:$0xff]
          %v1435 = vld [vmem:[%s1424 + $0x50] sm:$0xff]
          %v1436 = vld [vmem:[%s1424 + $0x58] sm:$0xff]
          %v1437 = vld [vmem:[%s1424 + $0x60] sm:$0xff]
          %v1438 = vld [vmem:[%s1424 + $0x68] sm:$0xff]
          %v1439 = vld [vmem:[%s1424 + $0x70] sm:$0xff]
          %v1440 = vld [vmem:[%s1424 + $0x78] sm:$0xff]
          %v1441 = vld [vmem:[#allocation4] sm:$0xff]
          %v1442 = vld [vmem:[#allocation4 + $0x8] sm:$0xff]
          %v1443 = vpack.c.bf16 %v1442, %v1441
          %vm1444 = vcmask 261120
          %v1446 = vsel %vm1444, %v1443, 0
          %1448 = vmatprep.subr.bf16.mxu0 %v1426
          %1449 = vmatpush1.bf16.msra.mxu0 %v1425
          %1450 = vmatprep.subr.bf16.mxu0 %v1434
          %1451 = vmatpush1.bf16.msra.mxu0 %v1433
          %1452 = vmatprep.subr.bf16.mxu0 0
          %1453 = vmatpush1.bf16.msra.mxu0 0
          %1454 = vmatprep.subr.bf16.mxu0 0
          %1455 = vmatpush1.bf16.msra.mxu0 0
          %1456 = vmatprep.subr.bf16.mxu0 0
          %1457 = vmatpush1.bf16.msra.mxu0 0
          %1458 = vmatprep.subr.bf16.mxu0 0
          %1459 = vmatpush1.bf16.msra.mxu0 0
          %1460 = vmatprep.subr.bf16.mxu0 0
          %1461 = vmatpush1.bf16.msra.mxu0 0
          %1462 = vmatprep.subr.bf16.mxu0 0
          %1463 = vmatpush1.bf16.msra.mxu0 0
          %1464 = vmatprep.subr.bf16.mxu0 0
          %1465 = vmatpush1.bf16.msra.mxu0 0
          %1466 = vmatprep.subr.bf16.mxu0 0
          %1467 = vmatpush1.bf16.msra.mxu0 0
          %1468 = vmatprep.subr.bf16.mxu0 0
          %1469 = vmatpush1.bf16.msra.mxu0 0
          %1470 = vmatprep.subr.bf16.mxu0 0
          %1471 = vmatpush1.bf16.msra.mxu0 0
          %1472 = vmatprep.subr.bf16.mxu0 0
          %1473 = vmatpush1.bf16.msra.mxu0 0
          %1474 = vmatprep.subr.bf16.mxu0 0
          %1475 = vmatpush1.bf16.msra.mxu0 0
          %1476 = vmatprep.subr.bf16.mxu0 0
          %1477 = vmatpush1.bf16.msra.mxu0 0
          %1478 = vmatprep.subr.bf16.mxu0 0
          %1479 = vmatpush1.bf16.msra.mxu0 0
          %1480 = vmatprep.mubr.bf16.mxu0 0
          %1481 = vmatmul.mubr.bf16.gmra.mrb[0].mxu0 %v1446
          %v1482 = vpop.f32.mrb[0].mxu0
          %v1483 = vadd.f32 0.0, %v1482
          %v1484 = vpop.f32.mrb[0].mxu0
          %v1485 = vadd.f32 0.0, %v1484
          %v1486 = vpop.f32.mrb[0].mxu0
          %v1487 = vadd.f32 0.0, %v1486
          %v1488 = vpop.f32.mrb[0].mxu0
          %v1489 = vadd.f32 0.0, %v1488
          %1490 = vdwg.mxu0
          %1491 = vmatprep.subr.bf16.mxu0 %v1428
          %1492 = vmatpush1.bf16.msra.mxu0 %v1427
          %1493 = vmatprep.subr.bf16.mxu0 %v1436
          %1494 = vmatpush1.bf16.msra.mxu0 %v1435
          %1495 = vmatprep.subr.bf16.mxu0 0
          %1496 = vmatpush1.bf16.msra.mxu0 0
          %1497 = vmatprep.subr.bf16.mxu0 0
          %1498 = vmatpush1.bf16.msra.mxu0 0
          %1499 = vmatprep.subr.bf16.mxu0 0
          %1500 = vmatpush1.bf16.msra.mxu0 0
          %1501 = vmatprep.subr.bf16.mxu0 0
          %1502 = vmatpush1.bf16.msra.mxu0 0
          %1503 = vmatprep.subr.bf16.mxu0 0
          %1504 = vmatpush1.bf16.msra.mxu0 0
          %1505 = vmatprep.subr.bf16.mxu0 0
          %1506 = vmatpush1.bf16.msra.mxu0 0
          %1507 = vmatprep.subr.bf16.mxu0 0
          %1508 = vmatpush1.bf16.msra.mxu0 0
          %1509 = vmatprep.subr.bf16.mxu0 0
          %1510 = vmatpush1.bf16.msra.mxu0 0
          %1511 = vmatprep.subr.bf16.mxu0 0
          %1512 = vmatpush1.bf16.msra.mxu0 0
          %1513 = vmatprep.subr.bf16.mxu0 0
          %1514 = vmatpush1.bf16.msra.mxu0 0
          %1515 = vmatprep.subr.bf16.mxu0 0
          %1516 = vmatpush1.bf16.msra.mxu0 0
          %1517 = vmatprep.subr.bf16.mxu0 0
          %1518 = vmatpush1.bf16.msra.mxu0 0
          %1519 = vmatprep.subr.bf16.mxu0 0
          %1520 = vmatpush1.bf16.msra.mxu0 0
          %1521 = vmatprep.subr.bf16.mxu0 0
          %1522 = vmatpush1.bf16.msra.mxu0 0
          %1523 = vmatprep.mubr.bf16.mxu0 0
          %1524 = vmatmul.mubr.bf16.gmra.mrb[0].mxu0 %v1446
          %v1525 = vpop.f32.mrb[0].mxu0
          %v1526 = vadd.f32 0.0, %v1525
          %v1527 = vpop.f32.mrb[0].mxu0
          %v1528 = vadd.f32 0.0, %v1527
          %v1529 = vpop.f32.mrb[0].mxu0
          %v1530 = vadd.f32 0.0, %v1529
          %v1531 = vpop.f32.mrb[0].mxu0
          %v1532 = vadd.f32 0.0, %v1531
          %1533 = vdwg.mxu0
          %1534 = vmatprep.subr.bf16.mxu0 %v1430
          %1535 = vmatpush1.bf16.msra.mxu0 %v1429
          %1536 = vmatprep.subr.bf16.mxu0 %v1438
          %1537 = vmatpush1.bf16.msra.mxu0 %v1437
          %1538 = vmatprep.subr.bf16.mxu0 0
          %1539 = vmatpush1.bf16.msra.mxu0 0
          %1540 = vmatprep.subr.bf16.mxu0 0
          %1541 = vmatpush1.bf16.msra.mxu0 0
          %1542 = vmatprep.subr.bf16.mxu0 0
          %1543 = vmatpush1.bf16.msra.mxu0 0
          %1544 = vmatprep.subr.bf16.mxu0 0
          %1545 = vmatpush1.bf16.msra.mxu0 0
          %1546 = vmatprep.subr.bf16.mxu0 0
          %1547 = vmatpush1.bf16.msra.mxu0 0
          %1548 = vmatprep.subr.bf16.mxu0 0
          %1549 = vmatpush1.bf16.msra.mxu0 0
          %1550 = vmatprep.subr.bf16.mxu0 0
          %1551 = vmatpush1.bf16.msra.mxu0 0
          %1552 = vmatprep.subr.bf16.mxu0 0
          %1553 = vmatpush1.bf16.msra.mxu0 0
          %1554 = vmatprep.subr.bf16.mxu0 0
          %1555 = vmatpush1.bf16.msra.mxu0 0
          %1556 = vmatprep.subr.bf16.mxu0 0
          %1557 = vmatpush1.bf16.msra.mxu0 0
          %1558 = vmatprep.subr.bf16.mxu0 0
          %1559 = vmatpush1.bf16.msra.mxu0 0
          %1560 = vmatprep.subr.bf16.mxu0 0
          %1561 = vmatpush1.bf16.msra.mxu0 0
          %1562 = vmatprep.subr.bf16.mxu0 0
          %1563 = vmatpush1.bf16.msra.mxu0 0
          %1564 = vmatprep.subr.bf16.mxu0 0
          %1565 = vmatpush1.bf16.msra.mxu0 0
          %1566 = vmatprep.mubr.bf16.mxu0 0
          %1567 = vmatmul.mubr.bf16.gmra.mrb[0].mxu0 %v1446
          %v1568 = vpop.f32.mrb[0].mxu0
          %v1569 = vadd.f32 0.0, %v1568
          %v1570 = vpop.f32.mrb[0].mxu0
          %v1571 = vadd.f32 0.0, %v1570
          %v1572 = vpop.f32.mrb[0].mxu0
          %v1573 = vadd.f32 0.0, %v1572
          %v1574 = vpop.f32.mrb[0].mxu0
          %v1575 = vadd.f32 0.0, %v1574
          %1576 = vdwg.mxu0
          %1577 = vmatprep.subr.bf16.mxu0 %v1432
          %1578 = vmatpush1.bf16.msra.mxu0 %v1431
          %1579 = vmatprep.subr.bf16.mxu0 %v1440
          %1580 = vmatpush1.bf16.msra.mxu0 %v1439
          %1581 = vmatprep.subr.bf16.mxu0 0
          %1582 = vmatpush1.bf16.msra.mxu0 0
          %1583 = vmatprep.subr.bf16.mxu0 0
          %1584 = vmatpush1.bf16.msra.mxu0 0
          %1585 = vmatprep.subr.bf16.mxu0 0
          %1586 = vmatpush1.bf16.msra.mxu0 0
          %1587 = vmatprep.subr.bf16.mxu0 0
          %1588 = vmatpush1.bf16.msra.mxu0 0
          %1589 = vmatprep.subr.bf16.mxu0 0
          %1590 = vmatpush1.bf16.msra.mxu0 0
          %1591 = vmatprep.subr.bf16.mxu0 0
          %1592 = vmatpush1.bf16.msra.mxu0 0
          %1593 = vmatprep.subr.bf16.mxu0 0
          %1594 = vmatpush1.bf16.msra.mxu0 0
          %1595 = vmatprep.subr.bf16.mxu0 0
          %1596 = vmatpush1.bf16.msra.mxu0 0
          %1597 = vmatprep.subr.bf16.mxu0 0
          %1598 = vmatpush1.bf16.msra.mxu0 0
          %1599 = vmatprep.subr.bf16.mxu0 0
          %1600 = vmatpush1.bf16.msra.mxu0 0
          %1601 = vmatprep.subr.bf16.mxu0 0
          %1602 = vmatpush1.bf16.msra.mxu0 0
          %1603 = vmatprep.subr.bf16.mxu0 0
          %1604 = vmatpush1.bf16.msra.mxu0 0
          %1605 = vmatprep.subr.bf16.mxu0 0
          %1606 = vmatpush1.bf16.msra.mxu0 0
          %1607 = vmatprep.subr.bf16.mxu0 0
          %1608 = vmatpush1.bf16.msra.mxu0 0
          %1609 = vmatprep.mubr.bf16.mxu0 0
          %1610 = vmatmul.mubr.bf16.gmra.mrb[0].mxu0 %v1446
          %v1611 = vpop.f32.mrb[0].mxu0
          %v1612 = vadd.f32 0.0, %v1611
          %v1613 = vpop.f32.mrb[0].mxu0
          %v1614 = vadd.f32 0.0, %v1613
          %v1615 = vpop.f32.mrb[0].mxu0
          %v1616 = vadd.f32 0.0, %v1615
          %v1617 = vpop.f32.mrb[0].mxu0
          %v1618 = vadd.f32 0.0, %v1617
          %1619 = vdwg.mxu0
          %v1621 = vlaneseq
          %v1622 = vshrl.u32 %v1621, 7
          %v1623 = vsub.s32 0, %v1622
          %v1624 = vrot.slane %v269, %v1623
          %v1625 = vlaneseq
          %v1626 = vshrl.u32 %v1625, 7
          %v1627 = vsub.s32 1, %v1626
          %v1628 = vrot.slane %v269, %v1627
          %v1629 = vlaneseq
          %v1630 = vshrl.u32 %v1629, 7
          %v1631 = vsub.s32 2, %v1630
          %v1632 = vrot.slane %v269, %v1631
          %v1633 = vlaneseq
          %v1634 = vshrl.u32 %v1633, 7
          %v1635 = vsub.s32 3, %v1634
          %v1636 = vrot.slane %v269, %v1635
          %v1637 = vlaneseq
          %v1638 = vshrl.u32 %v1637, 7
          %v1639 = vsub.s32 4, %v1638
          %v1640 = vrot.slane %v269, %v1639
          %v1641 = vlaneseq
          %v1642 = vshrl.u32 %v1641, 7
          %v1643 = vsub.s32 5, %v1642
          %v1644 = vrot.slane %v269, %v1643
          %v1645 = vlaneseq
          %v1646 = vshrl.u32 %v1645, 7
          %v1647 = vsub.s32 6, %v1646
          %v1648 = vrot.slane %v269, %v1647
          %v1649 = vlaneseq
          %v1650 = vshrl.u32 %v1649, 7
          %v1651 = vsub.s32 7, %v1650
          %v1652 = vrot.slane %v269, %v1651
          %v1661 = vmul.f32 %v1483, %v1624
          %v1662 = vmul.f32 %v1485, %v1628
          %v1663 = vmul.f32 %v1526, %v1632
          %v1664 = vmul.f32 %v1528, %v1636
          %v1665 = vmul.f32 %v1569, %v1640
          %v1666 = vmul.f32 %v1571, %v1644
          %v1667 = vmul.f32 %v1612, %v1648
          %v1668 = vmul.f32 %v1614, %v1652
          %v1669 = vmul.f32 %v1487, %v1624
          %v1670 = vmul.f32 %v1489, %v1628
          %v1671 = vmul.f32 %v1530, %v1632
          %v1672 = vmul.f32 %v1532, %v1636
          %v1673 = vmul.f32 %v1573, %v1640
          %v1674 = vmul.f32 %v1575, %v1644
          %v1675 = vmul.f32 %v1616, %v1648
          %v1676 = vmul.f32 %v1618, %v1652
          %v1677 = vld [vmem:[#allocation5] sm:$0xff]
          %v1678 = vld [vmem:[#allocation5 + $0x8] sm:$0xff]
          %v1679 = vrsqrt.pop %v1677
          %v1680 = vmul.f32 %v1677, %v1679
          %vm1681 = vcmp.eq.f32.partialorder %v1677, inf
          %v1682 = vsel %vm1681, %v1677, %v1680
          %vm1683 = vcmp.eq.f32.partialorder %v1677, 0.0
          %v1684 = vand.u32 %v1677, 2147483648
          %v1685 = vsel %vm1683, %v1684, %v1682
          %v1686 = vrsqrt.pop %v1678
          %v1687 = vmul.f32 %v1678, %v1686
          %vm1688 = vcmp.eq.f32.partialorder %v1678, inf
          %v1689 = vsel %vm1688, %v1678, %v1687
          %vm1690 = vcmp.eq.f32.partialorder %v1678, 0.0
          %v1691 = vand.u32 %v1678, 2147483648
          %v1692 = vsel %vm1690, %v1691, %v1689
          %v1693 = vmax.f32 %v1685, 1e-12
          %v1694 = vmax.f32 %v1692, 1e-12
          %v1695 = vrcp.pop %v1693
          %v1696 = vmul.f32 10.0, %v1695
          %v1697 = vrcp.pop %v1694
          %v1698 = vmul.f32 10.0, %v1697
          %1700 = vset.pattern.permute.xlu0 0
          %1701 = vperm.xlu0 %1700, %v1696
          %v1702 = vpop.permute.xlu0 %1701
          %1705 = vset.pattern.permute.xlu0 0
          %1706 = vperm.xlu0 %1705, %v1698
          %v1707 = vpop.permute.xlu0 %1706
          %v1709 = vmul.f32 %v1661, %v1702
          %v1710 = vmul.f32 %v1662, %v1702
          %v1711 = vmul.f32 %v1663, %v1702
          %v1712 = vmul.f32 %v1664, %v1702
          %v1713 = vmul.f32 %v1665, %v1702
          %v1714 = vmul.f32 %v1666, %v1702
          %v1715 = vmul.f32 %v1667, %v1702
          %v1716 = vmul.f32 %v1668, %v1702
          %v1717 = vmul.f32 %v1669, %v1707
          %v1718 = vmul.f32 %v1670, %v1707
          %v1719 = vmul.f32 %v1671, %v1707
          %v1720 = vmul.f32 %v1672, %v1707
          %v1721 = vmul.f32 %v1673, %v1707
          %v1722 = vmul.f32 %v1674, %v1707
          %v1723 = vmul.f32 %v1675, %v1707
          %v1724 = vmul.f32 %v1676, %v1707
          %v1725 = vsel %vm273, 1, 0
          %v1726 = vsel %vm274, 1, 0
          %vm1727 = vcmp.eq.s32.totalorder %v1725, 1
          %vm1728 = vcmp.eq.s32.totalorder %v1726, 1
          %v1729 = vsel %vm1727, %v1709, -1e+30
          %v1730 = vsel %vm1727, %v1710, -1e+30
          %v1731 = vsel %vm1727, %v1711, -1e+30
          %v1732 = vsel %vm1727, %v1712, -1e+30
          %v1733 = vsel %vm1727, %v1713, -1e+30
          %v1734 = vsel %vm1727, %v1714, -1e+30
          %v1735 = vsel %vm1727, %v1715, -1e+30
          %v1736 = vsel %vm1727, %v1716, -1e+30
          %v1737 = vsel %vm1728, %v1717, -1e+30
          %v1738 = vsel %vm1728, %v1718, -1e+30
          %v1739 = vsel %vm1728, %v1719, -1e+30
          %v1740 = vsel %vm1728, %v1720, -1e+30
          %v1741 = vsel %vm1728, %v1721, -1e+30
          %v1742 = vsel %vm1728, %v1722, -1e+30
          %v1743 = vsel %vm1728, %v1723, -1e+30
          %v1744 = vsel %vm1728, %v1724, -1e+30
          %v1745 = vmax.f32 %v1729, %v1737
          %v1746 = vrot.slane %v1745, 4
          %v1747 = vmax.f32 %v1745, %v1746
          %v1748 = vrot.slane %v1747, 2
          %v1749 = vmax.f32 %v1747, %v1748
          %v1750 = vrot.slane %v1749, 1
          %v1751 = vmax.f32 %v1749, %v1750
          %v1752 = vmax.f32 %v1730, %v1738
          %v1753 = vrot.slane %v1752, 4
          %v1754 = vmax.f32 %v1752, %v1753
          %v1755 = vrot.slane %v1754, 2
          %v1756 = vmax.f32 %v1754, %v1755
          %v1757 = vrot.slane %v1756, 1
          %v1758 = vmax.f32 %v1756, %v1757
          %v1759 = vmax.f32 %v1731, %v1739
          %v1760 = vrot.slane %v1759, 4
          %v1761 = vmax.f32 %v1759, %v1760
          %v1762 = vrot.slane %v1761, 2
          %v1763 = vmax.f32 %v1761, %v1762
          %v1764 = vrot.slane %v1763, 1
          %v1765 = vmax.f32 %v1763, %v1764
          %v1766 = vmax.f32 %v1732, %v1740
          %v1767 = vrot.slane %v1766, 4
          %v1768 = vmax.f32 %v1766, %v1767
          %v1769 = vrot.slane %v1768, 2
          %v1770 = vmax.f32 %v1768, %v1769
          %v1771 = vrot.slane %v1770, 1
          %v1772 = vmax.f32 %v1770, %v1771
          %v1773 = vmax.f32 %v1733, %v1741
          %v1774 = vrot.slane %v1773, 4
          %v1775 = vmax.f32 %v1773, %v1774
          %v1776 = vrot.slane %v1775, 2
          %v1777 = vmax.f32 %v1775, %v1776
          %v1778 = vrot.slane %v1777, 1
          %v1779 = vmax.f32 %v1777, %v1778
          %v1780 = vmax.f32 %v1734, %v1742
          %v1781 = vrot.slane %v1780, 4
          %v1782 = vmax.f32 %v1780, %v1781
          %v1783 = vrot.slane %v1782, 2
          %v1784 = vmax.f32 %v1782, %v1783
          %v1785 = vrot.slane %v1784, 1
          %v1786 = vmax.f32 %v1784, %v1785
          %v1787 = vmax.f32 %v1735, %v1743
          %v1788 = vrot.slane %v1787, 4
          %v1789 = vmax.f32 %v1787, %v1788
          %v1790 = vrot.slane %v1789, 2
          %v1791 = vmax.f32 %v1789, %v1790
          %v1792 = vrot.slane %v1791, 1
          %v1793 = vmax.f32 %v1791, %v1792
          %v1794 = vmax.f32 %v1736, %v1744
          %v1795 = vrot.slane %v1794, 4
          %v1796 = vmax.f32 %v1794, %v1795
          %v1797 = vrot.slane %v1796, 2
          %v1798 = vmax.f32 %v1796, %v1797
          %v1799 = vrot.slane %v1798, 1
          %v1800 = vmax.f32 %v1798, %v1799
          %v1801 = vsub.f32 %v1729, %v1751
          %v1802 = vsub.f32 %v1730, %v1758
          %v1803 = vsub.f32 %v1731, %v1765
          %v1804 = vsub.f32 %v1732, %v1772
          %v1805 = vsub.f32 %v1733, %v1779
          %v1806 = vsub.f32 %v1734, %v1786
          %v1807 = vsub.f32 %v1735, %v1793
          %v1808 = vsub.f32 %v1736, %v1800
          %v1809 = vsub.f32 %v1737, %v1751
          %v1810 = vsub.f32 %v1738, %v1758
          %v1811 = vsub.f32 %v1739, %v1765
          %v1812 = vsub.f32 %v1740, %v1772
          %v1813 = vsub.f32 %v1741, %v1779
          %v1814 = vsub.f32 %v1742, %v1786
          %v1815 = vsub.f32 %v1743, %v1793
          %v1816 = vsub.f32 %v1744, %v1800
          %v1817 = vmul.f32 %v1801, 1.442695
          %v1818 = vpow.pop %v1817
          %v1819 = vmul.f32 %v1802, 1.442695
          %v1820 = vpow.pop %v1819
          %v1821 = vmul.f32 %v1803, 1.442695
          %v1822 = vpow.pop %v1821
          %v1823 = vmul.f32 %v1804, 1.442695
          %v1824 = vpow.pop %v1823
          %v1825 = vmul.f32 %v1805, 1.442695
          %v1826 = vpow.pop %v1825
          %v1827 = vmul.f32 %v1806, 1.442695
          %v1828 = vpow.pop %v1827
          %v1829 = vmul.f32 %v1807, 1.442695
          %v1830 = vpow.pop %v1829
          %v1831 = vmul.f32 %v1808, 1.442695
          %v1832 = vpow.pop %v1831
          %v1833 = vmul.f32 %v1809, 1.442695
          %v1834 = vpow.pop %v1833
          %v1835 = vmul.f32 %v1810, 1.442695
          %v1836 = vpow.pop %v1835
          %v1837 = vmul.f32 %v1811, 1.442695
          %v1838 = vpow.pop %v1837
          %v1839 = vmul.f32 %v1812, 1.442695
          %v1840 = vpow.pop %v1839
          %v1841 = vmul.f32 %v1813, 1.442695
          %v1842 = vpow.pop %v1841
          %v1843 = vmul.f32 %v1814, 1.442695
          %v1844 = vpow.pop %v1843
          %v1845 = vmul.f32 %v1815, 1.442695
          %v1846 = vpow.pop %v1845
          %v1847 = vmul.f32 %v1816, 1.442695
          %v1848 = vpow.pop %v1847
          %v1849 = vadd.f32 %v1818, %v1834
          %v1850 = vrot.slane %v1849, 4
          %v1851 = vadd.f32 %v1849, %v1850
          %v1852 = vrot.slane %v1851, 2
          %v1853 = vadd.f32 %v1851, %v1852
          %v1854 = vrot.slane %v1853, 1
          %v1855 = vadd.f32 %v1853, %v1854
          %v1856 = vadd.f32 %v1820, %v1836
          %v1857 = vrot.slane %v1856, 4
          %v1858 = vadd.f32 %v1856, %v1857
          %v1859 = vrot.slane %v1858, 2
          %v1860 = vadd.f32 %v1858, %v1859
          %v1861 = vrot.slane %v1860, 1
          %v1862 = vadd.f32 %v1860, %v1861
          %v1863 = vadd.f32 %v1822, %v1838
          %v1864 = vrot.slane %v1863, 4
          %v1865 = vadd.f32 %v1863, %v1864
          %v1866 = vrot.slane %v1865, 2
          %v1867 = vadd.f32 %v1865, %v1866
          %v1868 = vrot.slane %v1867, 1
          %v1869 = vadd.f32 %v1867, %v1868
          %v1870 = vadd.f32 %v1824, %v1840
          %v1871 = vrot.slane %v1870, 4
          %v1872 = vadd.f32 %v1870, %v1871
          %v1873 = vrot.slane %v1872, 2
          %v1874 = vadd.f32 %v1872, %v1873
          %v1875 = vrot.slane %v1874, 1
          %v1876 = vadd.f32 %v1874, %v1875
          %v1877 = vadd.f32 %v1826, %v1842
          %v1878 = vrot.slane %v1877, 4
          %v1879 = vadd.f32 %v1877, %v1878
          %v1880 = vrot.slane %v1879, 2
          %v1881 = vadd.f32 %v1879, %v1880
          %v1882 = vrot.slane %v1881, 1
          %v1883 = vadd.f32 %v1881, %v1882
          %v1884 = vadd.f32 %v1828, %v1844
          %v1885 = vrot.slane %v1884, 4
          %v1886 = vadd.f32 %v1884, %v1885
          %v1887 = vrot.slane %v1886, 2
          %v1888 = vadd.f32 %v1886, %v1887
          %v1889 = vrot.slane %v1888, 1
          %v1890 = vadd.f32 %v1888, %v1889
          %v1891 = vadd.f32 %v1830, %v1846
          %v1892 = vrot.slane %v1891, 4
          %v1893 = vadd.f32 %v1891, %v1892
          %v1894 = vrot.slane %v1893, 2
          %v1895 = vadd.f32 %v1893, %v1894
          %v1896 = vrot.slane %v1895, 1
          %v1897 = vadd.f32 %v1895, %v1896
          %v1898 = vadd.f32 %v1832, %v1848
          %v1899 = vrot.slane %v1898, 4
          %v1900 = vadd.f32 %v1898, %v1899
          %v1901 = vrot.slane %v1900, 2
          %v1902 = vadd.f32 %v1900, %v1901
          %v1903 = vrot.slane %v1902, 1
          %v1904 = vadd.f32 %v1902, %v1903
          %v1905 = vlaneseq
          %v1906 = vshrl.u32 %v1905, 7
          %v1907 = vsub.s32 0, %v1906
          %v1908 = vrot.slane %v266, %v1907
          %v1909 = vlaneseq
          %v1910 = vshrl.u32 %v1909, 7
          %v1911 = vsub.s32 1, %v1910
          %v1912 = vrot.slane %v266, %v1911
          %v1913 = vlaneseq
          %v1914 = vshrl.u32 %v1913, 7
          %v1915 = vsub.s32 2, %v1914
          %v1916 = vrot.slane %v266, %v1915
          %v1917 = vlaneseq
          %v1918 = vshrl.u32 %v1917, 7
          %v1919 = vsub.s32 3, %v1918
          %v1920 = vrot.slane %v266, %v1919
          %v1921 = vlaneseq
          %v1922 = vshrl.u32 %v1921, 7
          %v1923 = vsub.s32 4, %v1922
          %v1924 = vrot.slane %v266, %v1923
          %v1925 = vlaneseq
          %v1926 = vshrl.u32 %v1925, 7
          %v1927 = vsub.s32 5, %v1926
          %v1928 = vrot.slane %v266, %v1927
          %v1929 = vlaneseq
          %v1930 = vshrl.u32 %v1929, 7
          %v1931 = vsub.s32 6, %v1930
          %v1932 = vrot.slane %v266, %v1931
          %v1933 = vlaneseq
          %v1934 = vshrl.u32 %v1933, 7
          %v1935 = vsub.s32 7, %v1934
          %v1936 = vrot.slane %v266, %v1935
          %vm1937 = vcmp.eq.s32.totalorder %v271, %v1908
          %vm1938 = vcmp.eq.s32.totalorder %v271, %v1912
          %vm1939 = vcmp.eq.s32.totalorder %v271, %v1916
          %vm1940 = vcmp.eq.s32.totalorder %v271, %v1920
          %vm1941 = vcmp.eq.s32.totalorder %v271, %v1924
          %vm1942 = vcmp.eq.s32.totalorder %v271, %v1928
          %vm1943 = vcmp.eq.s32.totalorder %v271, %v1932
          %vm1944 = vcmp.eq.s32.totalorder %v271, %v1936
          %vm1945 = vcmp.eq.s32.totalorder %v272, %v1908
          %vm1946 = vcmp.eq.s32.totalorder %v272, %v1912
          %vm1947 = vcmp.eq.s32.totalorder %v272, %v1916
          %vm1948 = vcmp.eq.s32.totalorder %v272, %v1920
          %vm1949 = vcmp.eq.s32.totalorder %v272, %v1924
          %vm1950 = vcmp.eq.s32.totalorder %v272, %v1928
          %vm1951 = vcmp.eq.s32.totalorder %v272, %v1932
          %vm1952 = vcmp.eq.s32.totalorder %v272, %v1936
          %v1953 = vsel %vm1937, %v1729, 0.0
          %v1954 = vsel %vm1938, %v1730, 0.0
          %v1955 = vsel %vm1939, %v1731, 0.0
          %v1956 = vsel %vm1940, %v1732, 0.0
          %v1957 = vsel %vm1941, %v1733, 0.0
          %v1958 = vsel %vm1942, %v1734, 0.0
          %v1959 = vsel %vm1943, %v1735, 0.0
          %v1960 = vsel %vm1944, %v1736, 0.0
          %v1961 = vsel %vm1945, %v1737, 0.0
          %v1962 = vsel %vm1946, %v1738, 0.0
          %v1963 = vsel %vm1947, %v1739, 0.0
          %v1964 = vsel %vm1948, %v1740, 0.0
          %v1965 = vsel %vm1949, %v1741, 0.0
          %v1966 = vsel %vm1950, %v1742, 0.0
          %v1967 = vsel %vm1951, %v1743, 0.0
          %v1968 = vsel %vm1952, %v1744, 0.0
          %v1969 = vadd.f32 %v1953, %v1961
          %v1970 = vrot.slane %v1969, 4
          %v1971 = vadd.f32 %v1969, %v1970
          %v1972 = vrot.slane %v1971, 2
          %v1973 = vadd.f32 %v1971, %v1972
          %v1974 = vrot.slane %v1973, 1
          %v1975 = vadd.f32 %v1973, %v1974
          %v1976 = vadd.f32 %v1954, %v1962
          %v1977 = vrot.slane %v1976, 4
          %v1978 = vadd.f32 %v1976, %v1977
          %v1979 = vrot.slane %v1978, 2
          %v1980 = vadd.f32 %v1978, %v1979
          %v1981 = vrot.slane %v1980, 1
          %v1982 = vadd.f32 %v1980, %v1981
          %v1983 = vadd.f32 %v1955, %v1963
          %v1984 = vrot.slane %v1983, 4
          %v1985 = vadd.f32 %v1983, %v1984
          %v1986 = vrot.slane %v1985, 2
          %v1987 = vadd.f32 %v1985, %v1986
          %v1988 = vrot.slane %v1987, 1
          %v1989 = vadd.f32 %v1987, %v1988
          %v1990 = vadd.f32 %v1956, %v1964
          %v1991 = vrot.slane %v1990, 4
          %v1992 = vadd.f32 %v1990, %v1991
          %v1993 = vrot.slane %v1992, 2
          %v1994 = vadd.f32 %v1992, %v1993
          %v1995 = vrot.slane %v1994, 1
          %v1996 = vadd.f32 %v1994, %v1995
          %v1997 = vadd.f32 %v1957, %v1965
          %v1998 = vrot.slane %v1997, 4
          %v1999 = vadd.f32 %v1997, %v1998
          %v2000 = vrot.slane %v1999, 2
          %v2001 = vadd.f32 %v1999, %v2000
          %v2002 = vrot.slane %v2001, 1
          %v2003 = vadd.f32 %v2001, %v2002
          %v2004 = vadd.f32 %v1958, %v1966
          %v2005 = vrot.slane %v2004, 4
          %v2006 = vadd.f32 %v2004, %v2005
          %v2007 = vrot.slane %v2006, 2
          %v2008 = vadd.f32 %v2006, %v2007
          %v2009 = vrot.slane %v2008, 1
          %v2010 = vadd.f32 %v2008, %v2009
          %v2011 = vadd.f32 %v1959, %v1967
          %v2012 = vrot.slane %v2011, 4
          %v2013 = vadd.f32 %v2011, %v2012
          %v2014 = vrot.slane %v2013, 2
          %v2015 = vadd.f32 %v2013, %v2014
          %v2016 = vrot.slane %v2015, 1
          %v2017 = vadd.f32 %v2015, %v2016
          %v2018 = vadd.f32 %v1960, %v1968
          %v2019 = vrot.slane %v2018, 4
          %v2020 = vadd.f32 %v2018, %v2019
          %v2021 = vrot.slane %v2020, 2
          %v2022 = vadd.f32 %v2020, %v2021
          %v2023 = vrot.slane %v2022, 1
          %v2024 = vadd.f32 %v2022, %v2023
          %v2025 = vlog2.pop %v1855
          %v2026 = vmul.f32 %v2025, 0.6931472
          %v2027 = vlog2.pop %v1862
          %v2028 = vmul.f32 %v2027, 0.6931472
          %v2029 = vlog2.pop %v1869
          %v2030 = vmul.f32 %v2029, 0.6931472
          %v2031 = vlog2.pop %v1876
          %v2032 = vmul.f32 %v2031, 0.6931472
          %v2033 = vlog2.pop %v1883
          %v2034 = vmul.f32 %v2033, 0.6931472
          %v2035 = vlog2.pop %v1890
          %v2036 = vmul.f32 %v2035, 0.6931472
          %v2037 = vlog2.pop %v1897
          %v2038 = vmul.f32 %v2037, 0.6931472
          %v2039 = vlog2.pop %v1904
          %v2040 = vmul.f32 %v2039, 0.6931472
          %v2041 = vadd.f32 %v2026, %v1751
          %v2042 = vadd.f32 %v2028, %v1758
          %v2043 = vadd.f32 %v2030, %v1765
          %v2044 = vadd.f32 %v2032, %v1772
          %v2045 = vadd.f32 %v2034, %v1779
          %v2046 = vadd.f32 %v2036, %v1786
          %v2047 = vadd.f32 %v2038, %v1793
          %v2048 = vadd.f32 %v2040, %v1800
          %v2049 = vsub.f32 %v2041, %v1975
          %v2050 = vsub.f32 %v2042, %v1982
          %v2051 = vsub.f32 %v2043, %v1989
          %v2052 = vsub.f32 %v2044, %v1996
          %v2053 = vsub.f32 %v2045, %v2003
          %v2054 = vsub.f32 %v2046, %v2010
          %v2055 = vsub.f32 %v2047, %v2017
          %v2056 = vsub.f32 %v2048, %v2024
          %v2057 = vmul.f32 %v2049, %v1624
          %v2058 = vmul.f32 %v2050, %v1628
          %v2059 = vmul.f32 %v2051, %v1632
          %v2060 = vmul.f32 %v2052, %v1636
          %v2061 = vmul.f32 %v2053, %v1640
          %v2062 = vmul.f32 %v2054, %v1644
          %v2063 = vmul.f32 %v2055, %v1648
          %v2064 = vmul.f32 %v2056, %v1652
          %v2065 = vld [vmem:[#allocation6] sm:$0x1]
          %vm2066 = vcmask 1040384
          %v2067 = vsel %vm2066, %v2057, 0.0
          %v2068 = vsel %vm2066, %v2058, 0.0
          %v2069 = vadd.f32 %v2067, %v2068
          %v2070 = vsel %vm2066, %v2059, 0.0
          %v2071 = vadd.f32 %v2069, %v2070
          %v2072 = vsel %vm2066, %v2060, 0.0
          %v2073 = vadd.f32 %v2071, %v2072
          %v2074 = vsel %vm2066, %v2061, 0.0
          %v2075 = vadd.f32 %v2073, %v2074
          %v2076 = vsel %vm2066, %v2062, 0.0
          %v2077 = vadd.f32 %v2075, %v2076
          %v2078 = vsel %vm2066, %v2063, 0.0
          %v2079 = vadd.f32 %v2077, %v2078
          %v2080 = vsel %vm2066, %v2064, 0.0
          %v2081 = vadd.f32 %v2079, %v2080
          %2082 = vadd.xlane.f32.xlu0 %v2081
          %v2083 = vpop.xlane.xlu0 %2082
          %v2084 = vadd.f32 %v2065, %v2083
          %vm2085 = vcmask 0
          %2086 = vst.msk [vmem:[#allocation6] sm:$0x1] %vm2085, %v2084
          %v2087 = vld [vmem:[#allocation7] sm:$0x1]
          %v2088 = vsel %vm2066, %v1624, 0.0
          %v2089 = vsel %vm2066, %v1628, 0.0
          %v2090 = vadd.f32 %v2088, %v2089
          %v2091 = vsel %vm2066, %v1632, 0.0
          %v2092 = vadd.f32 %v2090, %v2091
          %v2093 = vsel %vm2066, %v1636, 0.0
          %v2094 = vadd.f32 %v2092, %v2093
          %v2095 = vsel %vm2066, %v1640, 0.0
          %v2096 = vadd.f32 %v2094, %v2095
          %v2097 = vsel %vm2066, %v1644, 0.0
          %v2098 = vadd.f32 %v2096, %v2097
          %v2099 = vsel %vm2066, %v1648, 0.0
          %v2100 = vadd.f32 %v2098, %v2099
          %v2101 = vsel %vm2066, %v1652, 0.0
          %v2102 = vadd.f32 %v2100, %v2101
          %2103 = vadd.xlane.f32.xlu0 %v2102
          %v2104 = vpop.xlane.xlu0 %2103
          %v2105 = vadd.f32 %v2087, %v2104
          %2106 = vst.msk [vmem:[#allocation7] sm:$0x1] %vm2085, %v2105
        $region56: #{contrastive_intra_view_lucas_loss.1} parent=31 // pred_fallthru
          _
        %p2107 = pnand %p1410, %p281
        %p2108 = pneg %p2107
        // Predicated region
        $region57: #{contrastive_intra_view_lucas_loss.1} parent=31 // pred_check
          _
        $region58: #{contrastive_intra_view_lucas_loss.1} parent=31 // pred_check_branch
          %2110 = sbr.rel (%p2107) target = $region60
        $region59: #{contrastive_intra_view_lucas_loss.1} parent=31 // pred_region
          %v2111 = vld [vmem:[#allocation6] sm:$0x1]
          %v2112 = vld [vmem:[#allocation7] sm:$0x1]
          %v2113 = vmax.f32 %v2112, 1.0
          %v2114 = vrcp.pop %v2113
          %v2115 = vmul.f32 %v2111, %v2114
          %vm2116 = vcmask 0
          %2117 = vst.msk [vmem:[#allocation9] sm:$0x1] %vm2116, %v2115
          %v2118 = vld [vmem:[#allocation4] sm:$0xff]
          %v2119 = vld [vmem:[#allocation4 + $0x8] sm:$0xff]
          %vm2120 = vcmask 261120
          %2121 = vst.msk [vmem:[#allocation11] sm:$0xff] %vm2120, %v2118
          %2122 = vst.msk [vmem:[#allocation11 + $0x8] sm:$0xff] %vm2120, %v2119
        $region60: #{contrastive_intra_view_lucas_loss.1} parent=31 // pred_fallthru
          _
        // Predicated region
        $region61: #{contrastive_intra_view_lucas_loss.1} parent=31 // pred_check
          %p2123 = pneg %p133
        $region62: #{contrastive_intra_view_lucas_loss.1} parent=31 // pred_check_branch
          %2125 = sbr.rel (%p2123) target = $region64
        $region63: #{contrastive_intra_view_lucas_loss.1} parent=31 // pred_region
          %s2127 = ssub.s32 16, 16
          %2128 = vsyncadd [#allocation10], %s2127
          %s2130 = sshll.u32 [#allocation9], 4
          %s2131 = int_to_ptr.vmem [resolvable:$true] %s2130
          %2133 = dma.vmem_to_hbm [thread:$0]  %s2131, 16, %s3, [#allocation10]
        $region64: #{contrastive_intra_view_lucas_loss.1} parent=31 // pred_fallthru
          _
        // Predicated region
        $region65: #{contrastive_intra_view_lucas_loss.1} parent=31 // pred_check
          %p2134 = pneg %p154
        $region66: #{contrastive_intra_view_lucas_loss.1} parent=31 // pred_check_branch
          %2136 = sbr.rel (%p2134) target = $region68
        $region67: #{contrastive_intra_view_lucas_loss.1} parent=31 // pred_region
          %s2138 = ssub.s32 256, 256
          %2139 = vsyncadd [#allocation12], %s2138
          %s2140 = sshll.u32 [#allocation11], 4
          %s2141 = int_to_ptr.vmem [resolvable:$true] %s2140
          %2146 = dma.vmem_to_hbm [thread:$0]  %s2141, 256, %s4, [#allocation12], 128, 128, 8
        $region68: #{contrastive_intra_view_lucas_loss.1} parent=31 // pred_fallthru
          _
        // Predicated region
        $region69: #{contrastive_intra_view_lucas_loss.1} parent=31 // pred_check
          %p2147 = pneg %p133
        $region70: #{contrastive_intra_view_lucas_loss.1} parent=31 // pred_check_branch
          %2149 = sbr.rel (%p2147) target = $region72
        $region71: #{contrastive_intra_view_lucas_loss.1} parent=31 // pred_region
          %2150 = dma.done [#allocation10], 16
        $region72: #{contrastive_intra_view_lucas_loss.1} parent=31 // pred_fallthru
          _
        // Predicated region
        $region73: #{contrastive_intra_view_lucas_loss.1} parent=31 // pred_check
          %p2151 = pneg %p154
        $region74: #{contrastive_intra_view_lucas_loss.1} parent=31 // pred_check_branch
          %2153 = sbr.rel (%p2151) target = $region76
        $region75: #{contrastive_intra_view_lucas_loss.1} parent=31 // pred_region
          %2154 = dma.done [#allocation12], 256
        $region76: #{contrastive_intra_view_lucas_loss.1} parent=31 // pred_fallthru
          _
      $region32: #{contrastive_intra_view_lucas_loss.1} parent=5 // pred_fallthru
        _
      %p2155 = scmp.le.s32.totalorder 2, %s13
      // Predicated region
      $region77: #{contrastive_intra_view_lucas_loss.1} parent=5 // pred_check
        %p2156 = pneg %p2155
      $region78: #{contrastive_intra_view_lucas_loss.1} parent=5 // pred_check_branch
        %2158 = sbr.rel (%p2156) target = $region80
      $region79: #{contrastive_intra_view_lucas_loss.1} parent=5 // pred_region
        %s2159 = ssub.s32 %s13, 2
      $region80: #{contrastive_intra_view_lucas_loss.1} parent=5 // pred_fallthru
        _
    $region6: #{contrastive_intra_view_lucas_loss.1} parent=1 // loop_footer
      %s17 = sadd.s32 1, %s13
    $region7: #{contrastive_intra_view_lucas_loss.1} parent=1 // loop_footer_branch
      %12 = sbr.rel target = $region3
    $region8: #{contrastive_intra_view_lucas_loss.1} parent=1 // loop_exit
      _
    %2160 = vsyncpa [#allocation10], 1
    %s2161 = scalar_lea.sflag [#allocation10], 1
    %2162 = vsyncpa %s2161, 1
    %2163 = vsyncpa [#allocation12], 1

</llo_original>
